<compile_context>
chip_gen: v6e
topology: v6e:2x2x1
jax: 0.10.0
libtpu: 0.0.40
codegen_flags: <defaults>
</compile_context>

<pallas_src>
import jax
import jax.numpy as jnp
from jax.experimental import pallas as pl
from jax.experimental.pallas import tpu as pltpu


# -----------------------------------------------------------------------------
# Pallas kernel: three affine-folded heads = three weighted full reductions.
# Grid iterates over batch tiles; each step processes tb examples.
# -----------------------------------------------------------------------------
def _heads_kernel(x2_ref, x3_ref, x4_ref,
                  w2_ref, w3_ref, w4_ref,
                  cb_ref, o_ref):
    def head(x_ref, w_ref, bias):
        # x: (tb, Kr, 128) f32 features, w: (Kr, 128) f32 folded weight
        # (constant index_map -> stays VMEM resident, no per-step cast).
        prod = x_ref[...] * w_ref[...]                      # broadcast over batch dim
        part = jnp.sum(prod, axis=1)                        # sublane-first reduce -> (tb, 128)
        return jnp.sum(part, axis=1, keepdims=True) + bias  # one XLU reduce / example -> (tb, 1)

    # head 2: Conv2d(128,64,3,pad=3,dil=3) -> AdaptiveAvgPool2d(7) -> Conv2d(64,1,7) -> Sigmoid
    r2 = head(x2_ref, w2_ref, cb_ref[0])
    # head 3: Conv2d(256,16,1) -> Conv2d(16,1,14) -> Sigmoid
    r3 = head(x3_ref, w3_ref, cb_ref[1])
    # head 4: Conv2d(512,1,7) -> Sigmoid
    r4 = head(x4_ref, w4_ref, cb_ref[2])

    # Single lane-dense-ish store per step instead of three 1-lane masked stores.
    o_ref[...] = jax.nn.sigmoid(jnp.concatenate([r2, r3, r4], axis=1))


def run_heads(x2, x3, x4, p, *, tb=None):
    """x*: NCHW-flattened f32 features viewed as [B, K//128, 128]."""
    B = x2.shape[0]
    if tb is None:
        # Either one grid step (tb == padded batch) or tb a multiple of 8, so the
        # (tb, 3) output block always satisfies the (8, 128) tiling rule.
        tb = B if B <= 16 else 16
    B_pad = pl.cdiv(B, tb) * tb
    if B_pad != B:
        pad = lambda a: jnp.pad(a, ((0, B_pad - B), (0, 0), (0, 0)))
        x2, x3, x4 = pad(x2), pad(x3), pad(x4)
    nb = B_pad // tb

    def xspec(arr):                     # batch-tiled feature blocks
        return pl.BlockSpec((tb,) + arr.shape[1:], lambda b: (b, 0, 0))

    def wspec(arr):                     # full weight, constant index map -> resident
        return pl.BlockSpec(arr.shape, lambda b: (0, 0))

    k_total = sum(a.shape[1] * a.shape[2] for a in (x2, x3, x4))   # elems / example
    step_bytes = tb * k_total * 4
    w_bytes = k_total * 4
    # double-buffered feature tiles + resident weights + elementwise temporaries + margin
    vmem_limit = int(min(3 * step_bytes + 2 * w_bytes + (8 << 20), 60 << 20))

    cost = pl.CostEstimate(
        flops=2 * B_pad * k_total,
        transcendentals=3 * B_pad,
        bytes_accessed=B_pad * k_total * 4 + w_bytes + B_pad * 3 * 4,
    )

    grid_spec = pltpu.PrefetchScalarGridSpec(
        num_scalar_prefetch=0,
        grid=(nb,),
        in_specs=[
            xspec(x2), xspec(x3), xspec(x4),
            wspec(p["weff2"]), wspec(p["weff3"]), wspec(p["weff4"]),
            pl.BlockSpec(memory_space=pltpu.MemorySpace.SMEM),   # folded scalar biases
        ],
        out_specs=pl.BlockSpec((tb, 3), lambda b: (b, 0)),
    )
    out = pl.pallas_call(
        _heads_kernel,
        out_shape=jax.ShapeDtypeStruct((B_pad, 3), jnp.float32),
        grid_spec=grid_spec,
        compiler_params=pltpu.CompilerParams(
            dimension_semantics=("parallel",),        # batch tiles independent
            vmem_limit_bytes=vmem_limit),
        cost_estimate=cost,
    )(x2, x3, x4, p["weff2"], p["weff3"], p["weff4"], p["cb"])
    return out[:B]


# -----------------------------------------------------------------------------
# Parameter init + one-time affine fold (plain JAX, runs once).
# -----------------------------------------------------------------------------
def init_params(key):
    ks = jax.random.split(key, 12)

    def w(k, shape, scale):
        return jax.random.normal(k, shape, jnp.float32) * scale

    p = {
        "W2a": w(ks[0], (64, 128, 3, 3), 0.03),  "b2a": w(ks[1], (64,), 0.01),
        "W2b": w(ks[2], (1, 64, 7, 7), 0.03),    "b2b": w(ks[3], (1,), 0.01),
        "W3a": w(ks[4], (16, 256, 1, 1), 0.03),  "b3a": w(ks[5], (16,), 0.01),
        "W3b": w(ks[6], (1, 16, 14, 14), 0.03),  "b3b": w(ks[7], (1,), 0.01),
        "W4":  w(ks[8], (1, 512, 7, 7), 0.02),   "b4":  w(ks[9], (1,), 0.01),
        "Wf":  w(ks[10], (1, 3, 1, 1), 0.1),     "bf":  w(ks[11], (1,), 0.01),
    }

    # ---- head 2: dilated 3x3 conv -> AvgPool(28->7, exact 4x4 mean) -> 7x7 conv ----
    # The bias-free head is linear in its input, so the effective NCHW weight is
    # the gradient of the scalar output at x = 0 (exact).
    def head2_linear(x_nchw):                                  # (1,128,28,28) -> scalar
        y = jax.lax.conv_general_dilated(
            x_nchw, p["W2a"], (1, 1), [(3, 3), (3, 3)], rhs_dilation=(3, 3),
            dimension_numbers=("NCHW", "OIHW", "NCHW"))
        yp = y.reshape(1, 64, 7, 4, 7, 4).mean(axis=(3, 5))    # AdaptiveAvgPool2d(7) on 28x28
        return jnp.sum(yp[0] * p["W2b"][0])

    weff2 = jax.grad(head2_linear)(jnp.zeros((1, 128, 28, 28), jnp.float32))[0]
    p["weff2"] = weff2.reshape(128 * 28 * 28 // 128, 128)      # NCHW-flattened, f32
    c2 = p["b2b"][0] + jnp.sum(p["W2b"][0] * p["b2a"][:, None, None])

    # ---- head 3: 1x1 conv -> 14x14 conv ----
    w3a = p["W3a"][:, :, 0, 0]                                 # (16, 256)
    w3b = p["W3b"][0].reshape(16, 14 * 14)                     # (16, 196)
    p["weff3"] = (w3a.T @ w3b).reshape(256 * 14 * 14 // 128, 128)   # (C, H*W) NCHW order
    c3 = p["b3b"][0] + jnp.sum(p["W3b"][0] * p["b3a"][:, None, None])

    # ---- head 4: 7x7 conv is already one weighted full reduction ----
    p["weff4"] = p["W4"][0].reshape(512 * 7 * 7 // 128, 128)
    c4 = p["b4"][0]

    p["cb"] = jnp.stack([c2, c3, c4]).astype(jnp.float32)      # (3,) folded biases
    return p


# -----------------------------------------------------------------------------
# Forward: free NCHW reshape + kernel (jitted so the reshape is a bitcast, not
# an extra HBM pass).
# -----------------------------------------------------------------------------
@jax.jit
def tumor_classifier_forward(feats2, feats3, feats4, params):
    # TODO(synk): featureExtractor = lib.resnet.resnet34(in_feature=40, mid_out=True) is an
    # external dependency; its mid-level feature maps feats[2..4]
    # ([B,128,28,28], [B,256,14,14], [B,512,7,7]) are taken directly as inputs.
    B = feats2.shape[0]

    def flat(f):  # NCHW -> (B, K//128, 128): free contiguous view (C % 128 == 0), no transpose/cast
        C, H, W = f.shape[1:]
        return f.reshape(f.shape[0], C * H * W // 128, 128)

    out = run_heads(flat(feats2), flat(feats3), flat(feats4), params)   # (B, 3) f32
    o2 = out[:, 0].reshape(B, 1, 1)
    o3 = out[:, 1].reshape(B, 1, 1)
    o4 = out[:, 2].reshape(B, 1, 1)

    # classifier_final (Conv2d(3,1,1)+Sigmoid) is computed but never returned by the
    # PyTorch forward (returns (r, None)); dropped as dead code.
    # TODO(synk): utils.squeezeChannel assumed to be x.squeeze(dim=1) ([B,1,1,1] -> [B,1,1]);
    # kernel outputs are already produced in that squeezed form.
    return [o2, o3, o4], None


# -----------------------------------------------------------------------------
# Pure-JAX reference (lax convs, f32) for validation.
# -----------------------------------------------------------------------------
def _conv_nchw(x, w, b, padding, dilation=(1, 1)):
    y = jax.lax.conv_general_dilated(
        x, w, window_strides=(1, 1), padding=padding,
        rhs_dilation=dilation, dimension_numbers=("NCHW", "OIHW", "NCHW"))
    return y + b.reshape(1, -1, 1, 1)


def reference_forward(feats2, feats3, feats4, p):
    B = feats2.shape[0]
    y2 = _conv_nchw(feats2, p["W2a"], p["b2a"], [(3, 3), (3, 3)], (3, 3))
    y2p = y2.reshape(B, 64, 7, 4, 7, 4).mean(axis=(3, 5))       # AdaptiveAvgPool2d(7)
    r2 = jax.nn.sigmoid(_conv_nchw(y2p, p["W2b"], p["b2b"], [(0, 0), (0, 0)]))
    y3 = _conv_nchw(feats3, p["W3a"], p["b3a"], [(0, 0), (0, 0)])
    r3 = jax.nn.sigmoid(_conv_nchw(y3, p["W3b"], p["b3b"], [(0, 0), (0, 0)]))
    r4 = jax.nn.sigmoid(_conv_nchw(feats4, p["W4"], p["b4"], [(0, 0), (0, 0)]))
    return [jnp.squeeze(x, axis=1) for x in (r2, r3, r4)]


if __name__ == "__main__":
    key = jax.random.PRNGKey(0)
    kf2, kf3, kf4, kp = jax.random.split(key, 4)
    B = 2
    feats2 = jax.random.normal(kf2, (B, 128, 28, 28), jnp.float32)
    feats3 = jax.random.normal(kf3, (B, 256, 14, 14), jnp.float32)
    feats4 = jax.random.normal(kf4, (B, 512, 7, 7), jnp.float32)
    params = init_params(kp)

    r, aux = tumor_classifier_forward(feats2, feats3, feats4, params)
    jax.block_until_ready(r)
    assert aux is None

    ref = reference_forward(feats2, feats3, feats4, params)
    for got, want in zip(r, ref):
        assert got.shape == (B, 1, 1), got.shape
        assert bool(jnp.all(jnp.isfinite(got)))
        assert jnp.allclose(got, want, atol=1e-2, rtol=1e-2), (got, want)

    print("KERNEL_OK")
</pallas_src>

<mosaic_0001>
module attributes {stable_mosaic.version = 11 : i64} {
  func.func @_heads_kernel(%arg0: i32, %arg1: memref<2x784x128xf32, #tpu.memory_space<vmem>>, %arg2: memref<2x392x128xf32, #tpu.memory_space<vmem>>, %arg3: memref<2x196x128xf32, #tpu.memory_space<vmem>>, %arg4: memref<784x128xf32, #tpu.memory_space<vmem>>, %arg5: memref<392x128xf32, #tpu.memory_space<vmem>>, %arg6: memref<196x128xf32, #tpu.memory_space<vmem>>, %arg7: memref<3xf32, #tpu.memory_space<smem>>, %arg8: memref<2x3xf32, #tpu.memory_space<vmem>>) attributes {dimension_semantics = [#tpu.dimension_semantics<parallel>], iteration_bounds = array<i64: 1>, scalar_prefetch = 0 : i64, scratch_operands = 0 : i64, tpu.core_type = #tpu.core_type<tc>, window_params = [{transform_indices = @transform_0, window_bounds = array<i64: 2, 784, 128>}, {transform_indices = @transform_1, window_bounds = array<i64: 2, 392, 128>}, {transform_indices = @transform_2, window_bounds = array<i64: 2, 196, 128>}, {pipeline_mode = #tpu.pipeline_mode<synchronous>, transform_indices = @transform_3, window_bounds = array<i64: 784, 128>}, {pipeline_mode = #tpu.pipeline_mode<synchronous>, transform_indices = @transform_4, window_bounds = array<i64: 392, 128>}, {pipeline_mode = #tpu.pipeline_mode<synchronous>, transform_indices = @transform_5, window_bounds = array<i64: 196, 128>}, {transform_indices = @transform_6, window_bounds = array<i64: 3>}, {transform_indices = @transform_7, window_bounds = array<i64: 2, 3>}]} {
    %c0 = arith.constant 0 : index
    %0 = memref.load %arg7[%c0] : memref<3xf32, #tpu.memory_space<smem>>
    %c0_0 = arith.constant 0 : index
    %c0_1 = arith.constant 0 : index
    %c0_2 = arith.constant 0 : index
    %1 = vector.load %arg1[%c0_0, %c0_1, %c0_2] : memref<2x784x128xf32, #tpu.memory_space<vmem>>, vector<2x784x128xf32>
    %c0_3 = arith.constant 0 : index
    %c0_4 = arith.constant 0 : index
    %2 = vector.load %arg4[%c0_3, %c0_4] : memref<784x128xf32, #tpu.memory_space<vmem>>, vector<784x128xf32>
    %3 = vector.shape_cast %2 : vector<784x128xf32> to vector<1x784x128xf32>
    %4 = vector.broadcast %3 : vector<1x784x128xf32> to vector<2x784x128xf32>
    %5 = arith.mulf %1, %4 : vector<2x784x128xf32>
    %cst = arith.constant dense<0.000000e+00> : vector<2x128xf32>
    %6 = vector.multi_reduction <add>, %5, %cst [1] : vector<2x784x128xf32> to vector<2x128xf32>
    %cst_5 = arith.constant dense<0.000000e+00> : vector<2xf32>
    %7 = vector.multi_reduction <add>, %6, %cst_5 [1] : vector<2x128xf32> to vector<2xf32>
    %8 = vector.shape_cast %7 : vector<2xf32> to vector<2x1xf32>
    %9 = vector.broadcast %0 : f32 to vector<2x1xf32>
    %10 = arith.addf %8, %9 : vector<2x1xf32>
    %c1 = arith.constant 1 : index
    %11 = memref.load %arg7[%c1] : memref<3xf32, #tpu.memory_space<smem>>
    %c0_6 = arith.constant 0 : index
    %c0_7 = arith.constant 0 : index
    %c0_8 = arith.constant 0 : index
    %12 = vector.load %arg2[%c0_6, %c0_7, %c0_8] : memref<2x392x128xf32, #tpu.memory_space<vmem>>, vector<2x392x128xf32>
    %c0_9 = arith.constant 0 : index
    %c0_10 = arith.constant 0 : index
    %13 = vector.load %arg5[%c0_9, %c0_10] : memref<392x128xf32, #tpu.memory_space<vmem>>, vector<392x128xf32>
    %14 = vector.shape_cast %13 : vector<392x128xf32> to vector<1x392x128xf32>
    %15 = vector.broadcast %14 : vector<1x392x128xf32> to vector<2x392x128xf32>
    %16 = arith.mulf %12, %15 : vector<2x392x128xf32>
    %cst_11 = arith.constant dense<0.000000e+00> : vector<2x128xf32>
    %17 = vector.multi_reduction <add>, %16, %cst_11 [1] : vector<2x392x128xf32> to vector<2x128xf32>
    %cst_12 = arith.constant dense<0.000000e+00> : vector<2xf32>
    %18 = vector.multi_reduction <add>, %17, %cst_12 [1] : vector<2x128xf32> to vector<2xf32>
    %19 = vector.shape_cast %18 : vector<2xf32> to vector<2x1xf32>
    %20 = vector.broadcast %11 : f32 to vector<2x1xf32>
    %21 = arith.addf %19, %20 : vector<2x1xf32>
    %c2 = arith.constant 2 : index
    %22 = memref.load %arg7[%c2] : memref<3xf32, #tpu.memory_space<smem>>
    %c0_13 = arith.constant 0 : index
    %c0_14 = arith.constant 0 : index
    %c0_15 = arith.constant 0 : index
    %23 = vector.load %arg3[%c0_13, %c0_14, %c0_15] : memref<2x196x128xf32, #tpu.memory_space<vmem>>, vector<2x196x128xf32>
    %c0_16 = arith.constant 0 : index
    %c0_17 = arith.constant 0 : index
    %24 = vector.load %arg6[%c0_16, %c0_17] : memref<196x128xf32, #tpu.memory_space<vmem>>, vector<196x128xf32>
    %25 = vector.shape_cast %24 : vector<196x128xf32> to vector<1x196x128xf32>
    %26 = vector.broadcast %25 : vector<1x196x128xf32> to vector<2x196x128xf32>
    %27 = arith.mulf %23, %26 : vector<2x196x128xf32>
    %cst_18 = arith.constant dense<0.000000e+00> : vector<2x128xf32>
    %28 = vector.multi_reduction <add>, %27, %cst_18 [1] : vector<2x196x128xf32> to vector<2x128xf32>
    %cst_19 = arith.constant dense<0.000000e+00> : vector<2xf32>
    %29 = vector.multi_reduction <add>, %28, %cst_19 [1] : vector<2x128xf32> to vector<2xf32>
    %30 = vector.shape_cast %29 : vector<2xf32> to vector<2x1xf32>
    %31 = vector.broadcast %22 : f32 to vector<2x1xf32>
    %32 = arith.addf %30, %31 : vector<2x1xf32>
    %33 = tpu.concatenate %10, %21, %32 in 1 : vector<2x1xf32>, vector<2x1xf32>, vector<2x1xf32> -> vector<2x3xf32>
    %34 = arith.negf %33 : vector<2x3xf32>
    %35 = math.exp %34 : vector<2x3xf32>
    %cst_20 = arith.constant 1.000000e+00 : f32
    %36 = vector.broadcast %cst_20 : f32 to vector<2x3xf32>
    %37 = arith.addf %36, %35 : vector<2x3xf32>
    %38 = arith.divf %36, %37 : vector<2x3xf32>
    %c0_21 = arith.constant 0 : index
    %c0_22 = arith.constant 0 : index
    %39 = vector.load %arg8[%c0_21, %c0_22] : memref<2x3xf32, #tpu.memory_space<vmem>>, vector<2x3xf32>
    tpu.vector_store %arg8[%c0_21, %c0_22], %38 {strides = array<i32>} : memref<2x3xf32, #tpu.memory_space<vmem>>, vector<2x3xf32>,
    return
  }
  func.func @transform_0(%arg0: i32) -> (i32, i32, i32) {
    %c0_i32 = arith.constant 0 : i32
    %c0_i32_0 = arith.constant 0 : i32
    %c0_i32_1 = arith.constant 0 : i32
    return %arg0, %c0_i32, %c0_i32_0 : i32, i32, i32
  }
  func.func @transform_1(%arg0: i32) -> (i32, i32, i32) {
    %c0_i32 = arith.constant 0 : i32
    %c0_i32_0 = arith.constant 0 : i32
    %c0_i32_1 = arith.constant 0 : i32
    return %arg0, %c0_i32, %c0_i32_0 : i32, i32, i32
  }
  func.func @transform_2(%arg0: i32) -> (i32, i32, i32) {
    %c0_i32 = arith.constant 0 : i32
    %c0_i32_0 = arith.constant 0 : i32
    %c0_i32_1 = arith.constant 0 : i32
    return %arg0, %c0_i32, %c0_i32_0 : i32, i32, i32
  }
  func.func @transform_3(%arg0: i32) -> (i32, i32) {
    %c0_i32 = arith.constant 0 : i32
    %c0_i32_0 = arith.constant 0 : i32
    %c0_i32_1 = arith.constant 0 : i32
    return %c0_i32, %c0_i32_0 : i32, i32
  }
  func.func @transform_4(%arg0: i32) -> (i32, i32) {
    %c0_i32 = arith.constant 0 : i32
    %c0_i32_0 = arith.constant 0 : i32
    %c0_i32_1 = arith.constant 0 : i32
    return %c0_i32, %c0_i32_0 : i32, i32
  }
  func.func @transform_5(%arg0: i32) -> (i32, i32) {
    %c0_i32 = arith.constant 0 : i32
    %c0_i32_0 = arith.constant 0 : i32
    %c0_i32_1 = arith.constant 0 : i32
    return %c0_i32, %c0_i32_0 : i32, i32
  }
  func.func @transform_6(%arg0: i32) -> i32 {
    %c0_i32 = arith.constant 0 : i32
    %c0_i32_0 = arith.constant 0 : i32
    return %c0_i32 : i32
  }
  func.func @transform_7(%arg0: i32) -> (i32, i32) {
    %c0_i32 = arith.constant 0 : i32
    %c0_i32_0 = arith.constant 0 : i32
    return %arg0, %c0_i32 : i32, i32
  }
}

</mosaic_0001>

<llo_original>
// kernel: tumor_classifier_forward.1
$region0: #{tumor_classifier_forward.1}
  #allocation0 [shape = 'u32[]', space=smem, size = 0x4, offset = 0x4, fixed_abs, tag = 'smem constant byte address 0x4 - core index']
  #allocation1 [shape = 'u32[144,128]{1,0:T(1,128)}', space=vmem, size = 0x12000, scoped, tag = 'internal scratch']
  %s0 = inlined_call_operand.vmem [shape: f32[2,784,128], index: 0, kind: input, shape index: {}]
  %s1 = inlined_call_operand.vmem [shape: f32[2,392,128], index: 1, kind: input, shape index: {}]
  %s2 = inlined_call_operand.vmem [shape: f32[2,196,128], index: 2, kind: input, shape index: {}]
  %s3 = inlined_call_operand.vmem [shape: f32[784,128], index: 3, kind: input, shape index: {}]
  %s4 = inlined_call_operand.vmem [shape: f32[392,128], index: 4, kind: input, shape index: {}]
  %s5 = inlined_call_operand.vmem [shape: f32[196,128], index: 5, kind: input, shape index: {}]
  %s6 = inlined_call_operand.vmem [shape: f32[3], index: 6, kind: input, shape index: {}]
  %s7 = inlined_call_operand.vmem [shape: f32[2,3], index: 7, kind: output, shape index: {}]
  %s8 = sld [smem:[#allocation0]]
  $region42: #{tumor_classifier_forward.1} parent=0
    _
  %s10 = ssub.s32 1, %s8
  %s11 = scalar_select 0, %s10, %s8
  $region1: #{tumor_classifier_forward.1} parent=0
    #allocation2 [shape = 'u8[512]{0}', space=smem, size = 0x200, scoped, tag = 'input window, operand 6, single buffered']
    #allocation3 [shape = 's32[1]{0}', space=sflag, size = 0x4, scoped, tag = 'scoped memory for tumor_classifier_forward.1']
    %12 = vsyncpa [#allocation3], 0
    // Predicated region
    $region2: #{tumor_classifier_forward.1} parent=1 // pred_check
      _
    $region3: #{tumor_classifier_forward.1} parent=1 // pred_check_branch
      %14 = sbr.rel (0) target = $region5
    $region4: #{tumor_classifier_forward.1} parent=1 // pred_region
      _
    $region5: #{tumor_classifier_forward.1} parent=1 // pred_fallthru
      _
    // Predicated region
    $region6: #{tumor_classifier_forward.1} parent=1 // pred_check
      _
    $region7: #{tumor_classifier_forward.1} parent=1 // pred_check_branch
      %16 = sbr.rel (0) target = $region9
    $region8: #{tumor_classifier_forward.1} parent=1 // pred_region
      _
    $region9: #{tumor_classifier_forward.1} parent=1 // pred_fallthru
      _
    // Predicated region
    $region10: #{tumor_classifier_forward.1} parent=1 // pred_check
      _
    $region11: #{tumor_classifier_forward.1} parent=1 // pred_check_branch
      %18 = sbr.rel (0) target = $region13
    $region12: #{tumor_classifier_forward.1} parent=1 // pred_region
      _
    $region13: #{tumor_classifier_forward.1} parent=1 // pred_fallthru
      _
    // Predicated region
    $region14: #{tumor_classifier_forward.1} parent=1 // pred_check
      _
    $region15: #{tumor_classifier_forward.1} parent=1 // pred_check_branch
      %20 = sbr.rel (0) target = $region17
    $region16: #{tumor_classifier_forward.1} parent=1 // pred_region
      _
    $region17: #{tumor_classifier_forward.1} parent=1 // pred_fallthru
      _
    // Predicated region
    $region18: #{tumor_classifier_forward.1} parent=1 // pred_check
      _
    $region19: #{tumor_classifier_forward.1} parent=1 // pred_check_branch
      %22 = sbr.rel (0) target = $region21
    $region20: #{tumor_classifier_forward.1} parent=1 // pred_region
      _
    $region21: #{tumor_classifier_forward.1} parent=1 // pred_fallthru
      _
    // Predicated region
    $region22: #{tumor_classifier_forward.1} parent=1 // pred_check
      _
    $region23: #{tumor_classifier_forward.1} parent=1 // pred_check_branch
      %24 = sbr.rel (0) target = $region25
    $region24: #{tumor_classifier_forward.1} parent=1 // pred_region
      _
    $region25: #{tumor_classifier_forward.1} parent=1 // pred_fallthru
      _
    // Predicated region
    $region26: #{tumor_classifier_forward.1} parent=1 // pred_check
      _
    $region27: #{tumor_classifier_forward.1} parent=1 // pred_check_branch
      %26 = sbr.rel (0) target = $region29
    $region28: #{tumor_classifier_forward.1} parent=1 // pred_region
      %s28 = ssub.s32 16, 16
      %29 = vsyncadd [#allocation3], %s28
      %s31 = sshll.u32 %s6, 4
      %s32 = int_to_ptr.vmem [resolvable:$true] %s31
      %34 = dma.vmem_to_smem %s32, 16, [#allocation2], [#allocation3]
    $region29: #{tumor_classifier_forward.1} parent=1 // pred_fallthru
      _
    // Predicated region
    $region30: #{tumor_classifier_forward.1} parent=1 // pred_check
      _
    $region31: #{tumor_classifier_forward.1} parent=1 // pred_check_branch
      %36 = sbr.rel (0) target = $region33
    $region32: #{tumor_classifier_forward.1} parent=1 // pred_region
      %37 = dma.done [#allocation3], 16
    $region33: #{tumor_classifier_forward.1} parent=1 // pred_fallthru
      _
    %38 = sfence
    %s39 = sld [smem:[#allocation2]]
    %v40 = vld [vmem:[%s0] sm:$0xff]
    %v41 = vld [vmem:[%s0 + $0x8] sm:$0xff]
    %v42 = vld [vmem:[%s0 + $0x10] sm:$0xff]
    %v43 = vld [vmem:[%s0 + $0x18] sm:$0xff]
    %v44 = vld [vmem:[%s0 + $0x20] sm:$0xff]
    %v45 = vld [vmem:[%s0 + $0x28] sm:$0xff]
    %v46 = vld [vmem:[%s0 + $0x30] sm:$0xff]
    %v47 = vld [vmem:[%s0 + $0x38] sm:$0xff]
    %v48 = vld [vmem:[%s0 + $0x40] sm:$0xff]
    %v49 = vld [vmem:[%s0 + $0x48] sm:$0xff]
    %v50 = vld [vmem:[%s0 + $0x50] sm:$0xff]
    %v51 = vld [vmem:[%s0 + $0x58] sm:$0xff]
    %v52 = vld [vmem:[%s0 + $0x60] sm:$0xff]
    %v53 = vld [vmem:[%s0 + $0x68] sm:$0xff]
    %v54 = vld [vmem:[%s0 + $0x70] sm:$0xff]
    %v55 = vld [vmem:[%s0 + $0x78] sm:$0xff]
    %v56 = vld [vmem:[%s0 + $0x80] sm:$0xff]
    %v57 = vld [vmem:[%s0 + $0x88] sm:$0xff]
    %v58 = vld [vmem:[%s0 + $0x90] sm:$0xff]
    %v59 = vld [vmem:[%s0 + $0x98] sm:$0xff]
    %v60 = vld [vmem:[%s0 + $0xa0] sm:$0xff]
    %v61 = vld [vmem:[%s0 + $0xa8] sm:$0xff]
    %v62 = vld [vmem:[%s0 + $0xb0] sm:$0xff]
    %v63 = vld [vmem:[%s0 + $0xb8] sm:$0xff]
    %v64 = vld [vmem:[%s0 + $0xc0] sm:$0xff]
    %v65 = vld [vmem:[%s0 + $0xc8] sm:$0xff]
    %v66 = vld [vmem:[%s0 + $0xd0] sm:$0xff]
    %v67 = vld [vmem:[%s0 + $0xd8] sm:$0xff]
    %v68 = vld [vmem:[%s0 + $0xe0] sm:$0xff]
    %v69 = vld [vmem:[%s0 + $0xe8] sm:$0xff]
    %v70 = vld [vmem:[%s0 + $0xf0] sm:$0xff]
    %v71 = vld [vmem:[%s0 + $0xf8] sm:$0xff]
    %v72 = vld [vmem:[%s0 + $0x100] sm:$0xff]
    %v73 = vld [vmem:[%s0 + $0x108] sm:$0xff]
    %v74 = vld [vmem:[%s0 + $0x110] sm:$0xff]
    %v75 = vld [vmem:[%s0 + $0x118] sm:$0xff]
    %v76 = vld [vmem:[%s0 + $0x120] sm:$0xff]
    %v77 = vld [vmem:[%s0 + $0x128] sm:$0xff]
    %v78 = vld [vmem:[%s0 + $0x130] sm:$0xff]
    %v79 = vld [vmem:[%s0 + $0x138] sm:$0xff]
    %v80 = vld [vmem:[%s0 + $0x140] sm:$0xff]
    %v81 = vld [vmem:[%s0 + $0x148] sm:$0xff]
    %v82 = vld [vmem:[%s0 + $0x150] sm:$0xff]
    %v83 = vld [vmem:[%s0 + $0x158] sm:$0xff]
    %v84 = vld [vmem:[%s0 + $0x160] sm:$0xff]
    %v85 = vld [vmem:[%s0 + $0x168] sm:$0xff]
    %v86 = vld [vmem:[%s0 + $0x170] sm:$0xff]
    %v87 = vld [vmem:[%s0 + $0x178] sm:$0xff]
    %v88 = vld [vmem:[%s0 + $0x180] sm:$0xff]
    %v89 = vld [vmem:[%s0 + $0x188] sm:$0xff]
    %v90 = vld [vmem:[%s0 + $0x190] sm:$0xff]
    %v91 = vld [vmem:[%s0 + $0x198] sm:$0xff]
    %v92 = vld [vmem:[%s0 + $0x1a0] sm:$0xff]
    %v93 = vld [vmem:[%s0 + $0x1a8] sm:$0xff]
    %v94 = vld [vmem:[%s0 + $0x1b0] sm:$0xff]
    %v95 = vld [vmem:[%s0 + $0x1b8] sm:$0xff]
    %v96 = vld [vmem:[%s0 + $0x1c0] sm:$0xff]
    %v97 = vld [vmem:[%s0 + $0x1c8] sm:$0xff]
    %v98 = vld [vmem:[%s0 + $0x1d0] sm:$0xff]
    %v99 = vld [vmem:[%s0 + $0x1d8] sm:$0xff]
    %v100 = vld [vmem:[%s0 + $0x1e0] sm:$0xff]
    %v101 = vld [vmem:[%s0 + $0x1e8] sm:$0xff]
    %v102 = vld [vmem:[%s0 + $0x1f0] sm:$0xff]
    %v103 = vld [vmem:[%s0 + $0x1f8] sm:$0xff]
    %v104 = vld [vmem:[%s0 + $0x200] sm:$0xff]
    %v105 = vld [vmem:[%s0 + $0x208] sm:$0xff]
    %v106 = vld [vmem:[%s0 + $0x210] sm:$0xff]
    %v107 = vld [vmem:[%s0 + $0x218] sm:$0xff]
    %v108 = vld [vmem:[%s0 + $0x220] sm:$0xff]
    %v109 = vld [vmem:[%s0 + $0x228] sm:$0xff]
    %v110 = vld [vmem:[%s0 + $0x230] sm:$0xff]
    %v111 = vld [vmem:[%s0 + $0x238] sm:$0xff]
    %v112 = vld [vmem:[%s0 + $0x240] sm:$0xff]
    %v113 = vld [vmem:[%s0 + $0x248] sm:$0xff]
    %v114 = vld [vmem:[%s0 + $0x250] sm:$0xff]
    %v115 = vld [vmem:[%s0 + $0x258] sm:$0xff]
    %v116 = vld [vmem:[%s0 + $0x260] sm:$0xff]
    %v117 = vld [vmem:[%s0 + $0x268] sm:$0xff]
    %v118 = vld [vmem:[%s0 + $0x270] sm:$0xff]
    %v119 = vld [vmem:[%s0 + $0x278] sm:$0xff]
    %v120 = vld [vmem:[%s0 + $0x280] sm:$0xff]
    %v121 = vld [vmem:[%s0 + $0x288] sm:$0xff]
    %v122 = vld [vmem:[%s0 + $0x290] sm:$0xff]
    %v123 = vld [vmem:[%s0 + $0x298] sm:$0xff]
    %v124 = vld [vmem:[%s0 + $0x2a0] sm:$0xff]
    %v125 = vld [vmem:[%s0 + $0x2a8] sm:$0xff]
    %v126 = vld [vmem:[%s0 + $0x2b0] sm:$0xff]
    %v127 = vld [vmem:[%s0 + $0x2b8] sm:$0xff]
    %v128 = vld [vmem:[%s0 + $0x2c0] sm:$0xff]
    %v129 = vld [vmem:[%s0 + $0x2c8] sm:$0xff]
    %v130 = vld [vmem:[%s0 + $0x2d0] sm:$0xff]
    %v131 = vld [vmem:[%s0 + $0x2d8] sm:$0xff]
    %v132 = vld [vmem:[%s0 + $0x2e0] sm:$0xff]
    %v133 = vld [vmem:[%s0 + $0x2e8] sm:$0xff]
    %v134 = vld [vmem:[%s0 + $0x2f0] sm:$0xff]
    %v135 = vld [vmem:[%s0 + $0x2f8] sm:$0xff]
    %v136 = vld [vmem:[%s0 + $0x300] sm:$0xff]
    %v137 = vld [vmem:[%s0 + $0x308] sm:$0xff]
    %v138 = vld [vmem:[%s0 + $0x310] sm:$0xff]
    %v139 = vld [vmem:[%s0 + $0x318] sm:$0xff]
    %v140 = vld [vmem:[%s0 + $0x320] sm:$0xff]
    %v141 = vld [vmem:[%s0 + $0x328] sm:$0xff]
    %v142 = vld [vmem:[%s0 + $0x330] sm:$0xff]
    %v143 = vld [vmem:[%s0 + $0x338] sm:$0xff]
    %v144 = vld [vmem:[%s0 + $0x340] sm:$0xff]
    %v145 = vld [vmem:[%s0 + $0x348] sm:$0xff]
    %v146 = vld [vmem:[%s0 + $0x350] sm:$0xff]
    %v147 = vld [vmem:[%s0 + $0x358] sm:$0xff]
    %v148 = vld [vmem:[%s0 + $0x360] sm:$0xff]
    %v149 = vld [vmem:[%s0 + $0x368] sm:$0xff]
    %v150 = vld [vmem:[%s0 + $0x370] sm:$0xff]
    %v151 = vld [vmem:[%s0 + $0x378] sm:$0xff]
    %v152 = vld [vmem:[%s0 + $0x380] sm:$0xff]
    %v153 = vld [vmem:[%s0 + $0x388] sm:$0xff]
    %v154 = vld [vmem:[%s0 + $0x390] sm:$0xff]
    %v155 = vld [vmem:[%s0 + $0x398] sm:$0xff]
    %v156 = vld [vmem:[%s0 + $0x3a0] sm:$0xff]
    %v157 = vld [vmem:[%s0 + $0x3a8] sm:$0xff]
    %v158 = vld [vmem:[%s0 + $0x3b0] sm:$0xff]
    %v159 = vld [vmem:[%s0 + $0x3b8] sm:$0xff]
    %v160 = vld [vmem:[%s0 + $0x3c0] sm:$0xff]
    %v161 = vld [vmem:[%s0 + $0x3c8] sm:$0xff]
    %v162 = vld [vmem:[%s0 + $0x3d0] sm:$0xff]
    %v163 = vld [vmem:[%s0 + $0x3d8] sm:$0xff]
    %v164 = vld [vmem:[%s0 + $0x3e0] sm:$0xff]
    %v165 = vld [vmem:[%s0 + $0x3e8] sm:$0xff]
    %v166 = vld [vmem:[%s0 + $0x3f0] sm:$0xff]
    %v167 = vld [vmem:[%s0 + $0x3f8] sm:$0xff]
    %v168 = vld [vmem:[%s0 + $0x400] sm:$0xff]
    %v169 = vld [vmem:[%s0 + $0x408] sm:$0xff]
    %v170 = vld [vmem:[%s0 + $0x410] sm:$0xff]
    %v171 = vld [vmem:[%s0 + $0x418] sm:$0xff]
    %v172 = vld [vmem:[%s0 + $0x420] sm:$0xff]
    %v173 = vld [vmem:[%s0 + $0x428] sm:$0xff]
    %v174 = vld [vmem:[%s0 + $0x430] sm:$0xff]
    %v175 = vld [vmem:[%s0 + $0x438] sm:$0xff]
    %v176 = vld [vmem:[%s0 + $0x440] sm:$0xff]
    %v177 = vld [vmem:[%s0 + $0x448] sm:$0xff]
    %v178 = vld [vmem:[%s0 + $0x450] sm:$0xff]
    %v179 = vld [vmem:[%s0 + $0x458] sm:$0xff]
    %v180 = vld [vmem:[%s0 + $0x460] sm:$0xff]
    %v181 = vld [vmem:[%s0 + $0x468] sm:$0xff]
    %v182 = vld [vmem:[%s0 + $0x470] sm:$0xff]
    %v183 = vld [vmem:[%s0 + $0x478] sm:$0xff]
    %v184 = vld [vmem:[%s0 + $0x480] sm:$0xff]
    %v185 = vld [vmem:[%s0 + $0x488] sm:$0xff]
    %v186 = vld [vmem:[%s0 + $0x490] sm:$0xff]
    %v187 = vld [vmem:[%s0 + $0x498] sm:$0xff]
    %v188 = vld [vmem:[%s0 + $0x4a0] sm:$0xff]
    %v189 = vld [vmem:[%s0 + $0x4a8] sm:$0xff]
    %v190 = vld [vmem:[%s0 + $0x4b0] sm:$0xff]
    %v191 = vld [vmem:[%s0 + $0x4b8] sm:$0xff]
    %v192 = vld [vmem:[%s0 + $0x4c0] sm:$0xff]
    %v193 = vld [vmem:[%s0 + $0x4c8] sm:$0xff]
    %v194 = vld [vmem:[%s0 + $0x4d0] sm:$0xff]
    %v195 = vld [vmem:[%s0 + $0x4d8] sm:$0xff]
    %v196 = vld [vmem:[%s0 + $0x4e0] sm:$0xff]
    %v197 = vld [vmem:[%s0 + $0x4e8] sm:$0xff]
    %v198 = vld [vmem:[%s0 + $0x4f0] sm:$0xff]
    %v199 = vld [vmem:[%s0 + $0x4f8] sm:$0xff]
    %v200 = vld [vmem:[%s0 + $0x500] sm:$0xff]
    %v201 = vld [vmem:[%s0 + $0x508] sm:$0xff]
    %v202 = vld [vmem:[%s0 + $0x510] sm:$0xff]
    %v203 = vld [vmem:[%s0 + $0x518] sm:$0xff]
    %v204 = vld [vmem:[%s0 + $0x520] sm:$0xff]
    %v205 = vld [vmem:[%s0 + $0x528] sm:$0xff]
    %v206 = vld [vmem:[%s0 + $0x530] sm:$0xff]
    %v207 = vld [vmem:[%s0 + $0x538] sm:$0xff]
    %v208 = vld [vmem:[%s0 + $0x540] sm:$0xff]
    %v209 = vld [vmem:[%s0 + $0x548] sm:$0xff]
    %v210 = vld [vmem:[%s0 + $0x550] sm:$0xff]
    %v211 = vld [vmem:[%s0 + $0x558] sm:$0xff]
    %v212 = vld [vmem:[%s0 + $0x560] sm:$0xff]
    %v213 = vld [vmem:[%s0 + $0x568] sm:$0xff]
    %v214 = vld [vmem:[%s0 + $0x570] sm:$0xff]
    %v215 = vld [vmem:[%s0 + $0x578] sm:$0xff]
    %v216 = vld [vmem:[%s0 + $0x580] sm:$0xff]
    %v217 = vld [vmem:[%s0 + $0x588] sm:$0xff]
    %v218 = vld [vmem:[%s0 + $0x590] sm:$0xff]
    %v219 = vld [vmem:[%s0 + $0x598] sm:$0xff]
    %v220 = vld [vmem:[%s0 + $0x5a0] sm:$0xff]
    %v221 = vld [vmem:[%s0 + $0x5a8] sm:$0xff]
    %v222 = vld [vmem:[%s0 + $0x5b0] sm:$0xff]
    %v223 = vld [vmem:[%s0 + $0x5b8] sm:$0xff]
    %v224 = vld [vmem:[%s0 + $0x5c0] sm:$0xff]
    %v225 = vld [vmem:[%s0 + $0x5c8] sm:$0xff]
    %v226 = vld [vmem:[%s0 + $0x5d0] sm:$0xff]
    %v227 = vld [vmem:[%s0 + $0x5d8] sm:$0xff]
    %v228 = vld [vmem:[%s0 + $0x5e0] sm:$0xff]
    %v229 = vld [vmem:[%s0 + $0x5e8] sm:$0xff]
    %v230 = vld [vmem:[%s0 + $0x5f0] sm:$0xff]
    %v231 = vld [vmem:[%s0 + $0x5f8] sm:$0xff]
    %v232 = vld [vmem:[%s0 + $0x600] sm:$0xff]
    %v233 = vld [vmem:[%s0 + $0x608] sm:$0xff]
    %v234 = vld [vmem:[%s0 + $0x610] sm:$0xff]
    %v235 = vld [vmem:[%s0 + $0x618] sm:$0xff]
    %v236 = vld [vmem:[%s3] sm:$0xff]
    %v237 = vld [vmem:[%s3 + $0x8] sm:$0xff]
    %v238 = vld [vmem:[%s3 + $0x10] sm:$0xff]
    %v239 = vld [vmem:[%s3 + $0x18] sm:$0xff]
    %v240 = vld [vmem:[%s3 + $0x20] sm:$0xff]
    %v241 = vld [vmem:[%s3 + $0x28] sm:$0xff]
    %v242 = vld [vmem:[%s3 + $0x30] sm:$0xff]
    %v243 = vld [vmem:[%s3 + $0x38] sm:$0xff]
    %v244 = vld [vmem:[%s3 + $0x40] sm:$0xff]
    %v245 = vld [vmem:[%s3 + $0x48] sm:$0xff]
    %v246 = vld [vmem:[%s3 + $0x50] sm:$0xff]
    %v247 = vld [vmem:[%s3 + $0x58] sm:$0xff]
    %v248 = vld [vmem:[%s3 + $0x60] sm:$0xff]
    %v249 = vld [vmem:[%s3 + $0x68] sm:$0xff]
    %v250 = vld [vmem:[%s3 + $0x70] sm:$0xff]
    %v251 = vld [vmem:[%s3 + $0x78] sm:$0xff]
    %v252 = vld [vmem:[%s3 + $0x80] sm:$0xff]
    %v253 = vld [vmem:[%s3 + $0x88] sm:$0xff]
    %v254 = vld [vmem:[%s3 + $0x90] sm:$0xff]
    %v255 = vld [vmem:[%s3 + $0x98] sm:$0xff]
    %v256 = vld [vmem:[%s3 + $0xa0] sm:$0xff]
    %v257 = vld [vmem:[%s3 + $0xa8] sm:$0xff]
    %v258 = vld [vmem:[%s3 + $0xb0] sm:$0xff]
    %v259 = vld [vmem:[%s3 + $0xb8] sm:$0xff]
    %v260 = vld [vmem:[%s3 + $0xc0] sm:$0xff]
    %v261 = vld [vmem:[%s3 + $0xc8] sm:$0xff]
    %v262 = vld [vmem:[%s3 + $0xd0] sm:$0xff]
    %v263 = vld [vmem:[%s3 + $0xd8] sm:$0xff]
    %v264 = vld [vmem:[%s3 + $0xe0] sm:$0xff]
    %v265 = vld [vmem:[%s3 + $0xe8] sm:$0xff]
    %v266 = vld [vmem:[%s3 + $0xf0] sm:$0xff]
    %v267 = vld [vmem:[%s3 + $0xf8] sm:$0xff]
    %v268 = vld [vmem:[%s3 + $0x100] sm:$0xff]
    %v269 = vld [vmem:[%s3 + $0x108] sm:$0xff]
    %v270 = vld [vmem:[%s3 + $0x110] sm:$0xff]
    %v271 = vld [vmem:[%s3 + $0x118] sm:$0xff]
    %v272 = vld [vmem:[%s3 + $0x120] sm:$0xff]
    %v273 = vld [vmem:[%s3 + $0x128] sm:$0xff]
    %v274 = vld [vmem:[%s3 + $0x130] sm:$0xff]
    %v275 = vld [vmem:[%s3 + $0x138] sm:$0xff]
    %v276 = vld [vmem:[%s3 + $0x140] sm:$0xff]
    %v277 = vld [vmem:[%s3 + $0x148] sm:$0xff]
    %v278 = vld [vmem:[%s3 + $0x150] sm:$0xff]
    %v279 = vld [vmem:[%s3 + $0x158] sm:$0xff]
    %v280 = vld [vmem:[%s3 + $0x160] sm:$0xff]
    %v281 = vld [vmem:[%s3 + $0x168] sm:$0xff]
    %v282 = vld [vmem:[%s3 + $0x170] sm:$0xff]
    %v283 = vld [vmem:[%s3 + $0x178] sm:$0xff]
    %v284 = vld [vmem:[%s3 + $0x180] sm:$0xff]
    %v285 = vld [vmem:[%s3 + $0x188] sm:$0xff]
    %v286 = vld [vmem:[%s3 + $0x190] sm:$0xff]
    %v287 = vld [vmem:[%s3 + $0x198] sm:$0xff]
    %v288 = vld [vmem:[%s3 + $0x1a0] sm:$0xff]
    %v289 = vld [vmem:[%s3 + $0x1a8] sm:$0xff]
    %v290 = vld [vmem:[%s3 + $0x1b0] sm:$0xff]
    %v291 = vld [vmem:[%s3 + $0x1b8] sm:$0xff]
    %v292 = vld [vmem:[%s3 + $0x1c0] sm:$0xff]
    %v293 = vld [vmem:[%s3 + $0x1c8] sm:$0xff]
    %v294 = vld [vmem:[%s3 + $0x1d0] sm:$0xff]
    %v295 = vld [vmem:[%s3 + $0x1d8] sm:$0xff]
    %v296 = vld [vmem:[%s3 + $0x1e0] sm:$0xff]
    %v297 = vld [vmem:[%s3 + $0x1e8] sm:$0xff]
    %v298 = vld [vmem:[%s3 + $0x1f0] sm:$0xff]
    %v299 = vld [vmem:[%s3 + $0x1f8] sm:$0xff]
    %v300 = vld [vmem:[%s3 + $0x200] sm:$0xff]
    %v301 = vld [vmem:[%s3 + $0x208] sm:$0xff]
    %v302 = vld [vmem:[%s3 + $0x210] sm:$0xff]
    %v303 = vld [vmem:[%s3 + $0x218] sm:$0xff]
    %v304 = vld [vmem:[%s3 + $0x220] sm:$0xff]
    %v305 = vld [vmem:[%s3 + $0x228] sm:$0xff]
    %v306 = vld [vmem:[%s3 + $0x230] sm:$0xff]
    %v307 = vld [vmem:[%s3 + $0x238] sm:$0xff]
    %v308 = vld [vmem:[%s3 + $0x240] sm:$0xff]
    %v309 = vld [vmem:[%s3 + $0x248] sm:$0xff]
    %v310 = vld [vmem:[%s3 + $0x250] sm:$0xff]
    %v311 = vld [vmem:[%s3 + $0x258] sm:$0xff]
    %v312 = vld [vmem:[%s3 + $0x260] sm:$0xff]
    %v313 = vld [vmem:[%s3 + $0x268] sm:$0xff]
    %v314 = vld [vmem:[%s3 + $0x270] sm:$0xff]
    %v315 = vld [vmem:[%s3 + $0x278] sm:$0xff]
    %v316 = vld [vmem:[%s3 + $0x280] sm:$0xff]
    %v317 = vld [vmem:[%s3 + $0x288] sm:$0xff]
    %v318 = vld [vmem:[%s3 + $0x290] sm:$0xff]
    %v319 = vld [vmem:[%s3 + $0x298] sm:$0xff]
    %v320 = vld [vmem:[%s3 + $0x2a0] sm:$0xff]
    %v321 = vld [vmem:[%s3 + $0x2a8] sm:$0xff]
    %v322 = vld [vmem:[%s3 + $0x2b0] sm:$0xff]
    %v323 = vld [vmem:[%s3 + $0x2b8] sm:$0xff]
    %v324 = vld [vmem:[%s3 + $0x2c0] sm:$0xff]
    %v325 = vld [vmem:[%s3 + $0x2c8] sm:$0xff]
    %v326 = vld [vmem:[%s3 + $0x2d0] sm:$0xff]
    %v327 = vld [vmem:[%s3 + $0x2d8] sm:$0xff]
    %v328 = vld [vmem:[%s3 + $0x2e0] sm:$0xff]
    %v329 = vld [vmem:[%s3 + $0x2e8] sm:$0xff]
    %v330 = vld [vmem:[%s3 + $0x2f0] sm:$0xff]
    %v331 = vld [vmem:[%s3 + $0x2f8] sm:$0xff]
    %v332 = vld [vmem:[%s3 + $0x300] sm:$0xff]
    %v333 = vld [vmem:[%s3 + $0x308] sm:$0xff]
    %v334 = vmul.f32 %v40, %v236
    %v335 = vmul.f32 %v41, %v237
    %v336 = vmul.f32 %v42, %v238
    %v337 = vmul.f32 %v43, %v239
    %v338 = vmul.f32 %v44, %v240
    %v339 = vmul.f32 %v45, %v241
    %v340 = vmul.f32 %v46, %v242
    %v341 = vmul.f32 %v47, %v243
    %v342 = vmul.f32 %v48, %v244
    %v343 = vmul.f32 %v49, %v245
    %v344 = vmul.f32 %v50, %v246
    %v345 = vmul.f32 %v51, %v247
    %v346 = vmul.f32 %v52, %v248
    %v347 = vmul.f32 %v53, %v249
    %v348 = vmul.f32 %v54, %v250
    %v349 = vmul.f32 %v55, %v251
    %v350 = vmul.f32 %v56, %v252
    %v351 = vmul.f32 %v57, %v253
    %v352 = vmul.f32 %v58, %v254
    %v353 = vmul.f32 %v59, %v255
    %v354 = vmul.f32 %v60, %v256
    %v355 = vmul.f32 %v61, %v257
    %v356 = vmul.f32 %v62, %v258
    %v357 = vmul.f32 %v63, %v259
    %v358 = vmul.f32 %v64, %v260
    %v359 = vmul.f32 %v65, %v261
    %v360 = vmul.f32 %v66, %v262
    %v361 = vmul.f32 %v67, %v263
    %v362 = vmul.f32 %v68, %v264
    %v363 = vmul.f32 %v69, %v265
    %v364 = vmul.f32 %v70, %v266
    %v365 = vmul.f32 %v71, %v267
    %v366 = vmul.f32 %v72, %v268
    %v367 = vmul.f32 %v73, %v269
    %v368 = vmul.f32 %v74, %v270
    %v369 = vmul.f32 %v75, %v271
    %v370 = vmul.f32 %v76, %v272
    %v371 = vmul.f32 %v77, %v273
    %v372 = vmul.f32 %v78, %v274
    %v373 = vmul.f32 %v79, %v275
    %v374 = vmul.f32 %v80, %v276
    %v375 = vmul.f32 %v81, %v277
    %v376 = vmul.f32 %v82, %v278
    %v377 = vmul.f32 %v83, %v279
    %v378 = vmul.f32 %v84, %v280
    %v379 = vmul.f32 %v85, %v281
    %v380 = vmul.f32 %v86, %v282
    %v381 = vmul.f32 %v87, %v283
    %v382 = vmul.f32 %v88, %v284
    %v383 = vmul.f32 %v89, %v285
    %v384 = vmul.f32 %v90, %v286
    %v385 = vmul.f32 %v91, %v287
    %v386 = vmul.f32 %v92, %v288
    %v387 = vmul.f32 %v93, %v289
    %v388 = vmul.f32 %v94, %v290
    %v389 = vmul.f32 %v95, %v291
    %v390 = vmul.f32 %v96, %v292
    %v391 = vmul.f32 %v97, %v293
    %v392 = vmul.f32 %v98, %v294
    %v393 = vmul.f32 %v99, %v295
    %v394 = vmul.f32 %v100, %v296
    %v395 = vmul.f32 %v101, %v297
    %v396 = vmul.f32 %v102, %v298
    %v397 = vmul.f32 %v103, %v299
    %v398 = vmul.f32 %v104, %v300
    %v399 = vmul.f32 %v105, %v301
    %v400 = vmul.f32 %v106, %v302
    %v401 = vmul.f32 %v107, %v303
    %v402 = vmul.f32 %v108, %v304
    %v403 = vmul.f32 %v109, %v305
    %v404 = vmul.f32 %v110, %v306
    %v405 = vmul.f32 %v111, %v307
    %v406 = vmul.f32 %v112, %v308
    %v407 = vmul.f32 %v113, %v309
    %v408 = vmul.f32 %v114, %v310
    %v409 = vmul.f32 %v115, %v311
    %v410 = vmul.f32 %v116, %v312
    %v411 = vmul.f32 %v117, %v313
    %v412 = vmul.f32 %v118, %v314
    %v413 = vmul.f32 %v119, %v315
    %v414 = vmul.f32 %v120, %v316
    %v415 = vmul.f32 %v121, %v317
    %v416 = vmul.f32 %v122, %v318
    %v417 = vmul.f32 %v123, %v319
    %v418 = vmul.f32 %v124, %v320
    %v419 = vmul.f32 %v125, %v321
    %v420 = vmul.f32 %v126, %v322
    %v421 = vmul.f32 %v127, %v323
    %v422 = vmul.f32 %v128, %v324
    %v423 = vmul.f32 %v129, %v325
    %v424 = vmul.f32 %v130, %v326
    %v425 = vmul.f32 %v131, %v327
    %v426 = vmul.f32 %v132, %v328
    %v427 = vmul.f32 %v133, %v329
    %v428 = vmul.f32 %v134, %v330
    %v429 = vmul.f32 %v135, %v331
    %v430 = vmul.f32 %v136, %v332
    %v431 = vmul.f32 %v137, %v333
    %v432 = vmul.f32 %v138, %v236
    %v433 = vmul.f32 %v139, %v237
    %v434 = vmul.f32 %v140, %v238
    %v435 = vmul.f32 %v141, %v239
    %v436 = vmul.f32 %v142, %v240
    %v437 = vmul.f32 %v143, %v241
    %v438 = vmul.f32 %v144, %v242
    %v439 = vmul.f32 %v145, %v243
    %v440 = vmul.f32 %v146, %v244
    %v441 = vmul.f32 %v147, %v245
    %v442 = vmul.f32 %v148, %v246
    %v443 = vmul.f32 %v149, %v247
    %v444 = vmul.f32 %v150, %v248
    %v445 = vmul.f32 %v151, %v249
    %v446 = vmul.f32 %v152, %v250
    %v447 = vmul.f32 %v153, %v251
    %v448 = vmul.f32 %v154, %v252
    %v449 = vmul.f32 %v155, %v253
    %v450 = vmul.f32 %v156, %v254
    %v451 = vmul.f32 %v157, %v255
    %v452 = vmul.f32 %v158, %v256
    %v453 = vmul.f32 %v159, %v257
    %v454 = vmul.f32 %v160, %v258
    %v455 = vmul.f32 %v161, %v259
    %v456 = vmul.f32 %v162, %v260
    %v457 = vmul.f32 %v163, %v261
    %v458 = vmul.f32 %v164, %v262
    %v459 = vmul.f32 %v165, %v263
    %v460 = vmul.f32 %v166, %v264
    %v461 = vmul.f32 %v167, %v265
    %v462 = vmul.f32 %v168, %v266
    %v463 = vmul.f32 %v169, %v267
    %v464 = vmul.f32 %v170, %v268
    %v465 = vmul.f32 %v171, %v269
    %v466 = vmul.f32 %v172, %v270
    %v467 = vmul.f32 %v173, %v271
    %v468 = vmul.f32 %v174, %v272
    %v469 = vmul.f32 %v175, %v273
    %v470 = vmul.f32 %v176, %v274
    %v471 = vmul.f32 %v177, %v275
    %v472 = vmul.f32 %v178, %v276
    %v473 = vmul.f32 %v179, %v277
    %v474 = vmul.f32 %v180, %v278
    %v475 = vmul.f32 %v181, %v279
    %v476 = vmul.f32 %v182, %v280
    %v477 = vmul.f32 %v183, %v281
    %v478 = vmul.f32 %v184, %v282
    %v479 = vmul.f32 %v185, %v283
    %v480 = vmul.f32 %v186, %v284
    %v481 = vmul.f32 %v187, %v285
    %v482 = vmul.f32 %v188, %v286
    %v483 = vmul.f32 %v189, %v287
    %v484 = vmul.f32 %v190, %v288
    %v485 = vmul.f32 %v191, %v289
    %v486 = vmul.f32 %v192, %v290
    %v487 = vmul.f32 %v193, %v291
    %v488 = vmul.f32 %v194, %v292
    %v489 = vmul.f32 %v195, %v293
    %v490 = vmul.f32 %v196, %v294
    %v491 = vmul.f32 %v197, %v295
    %v492 = vmul.f32 %v198, %v296
    %v493 = vmul.f32 %v199, %v297
    %v494 = vmul.f32 %v200, %v298
    %v495 = vmul.f32 %v201, %v299
    %v496 = vmul.f32 %v202, %v300
    %v497 = vmul.f32 %v203, %v301
    %v498 = vmul.f32 %v204, %v302
    %v499 = vmul.f32 %v205, %v303
    %v500 = vmul.f32 %v206, %v304
    %v501 = vmul.f32 %v207, %v305
    %v502 = vmul.f32 %v208, %v306
    %v503 = vmul.f32 %v209, %v307
    %v504 = vmul.f32 %v210, %v308
    %v505 = vmul.f32 %v211, %v309
    %v506 = vmul.f32 %v212, %v310
    %v507 = vmul.f32 %v213, %v311
    %v508 = vmul.f32 %v214, %v312
    %v509 = vmul.f32 %v215, %v313
    %v510 = vmul.f32 %v216, %v314
    %v511 = vmul.f32 %v217, %v315
    %v512 = vmul.f32 %v218, %v316
    %v513 = vmul.f32 %v219, %v317
    %v514 = vmul.f32 %v220, %v318
    %v515 = vmul.f32 %v221, %v319
    %v516 = vmul.f32 %v222, %v320
    %v517 = vmul.f32 %v223, %v321
    %v518 = vmul.f32 %v224, %v322
    %v519 = vmul.f32 %v225, %v323
    %v520 = vmul.f32 %v226, %v324
    %v521 = vmul.f32 %v227, %v325
    %v522 = vmul.f32 %v228, %v326
    %v523 = vmul.f32 %v229, %v327
    %v524 = vmul.f32 %v230, %v328
    %v525 = vmul.f32 %v231, %v329
    %v526 = vmul.f32 %v232, %v330
    %v527 = vmul.f32 %v233, %v331
    %v528 = vmul.f32 %v234, %v332
    %v529 = vmul.f32 %v235, %v333
    %v530 = vadd.f32 %v334, %v335
    %v531 = vadd.f32 %v530, %v336
    %v532 = vadd.f32 %v531, %v337
    %v533 = vadd.f32 %v532, %v338
    %v534 = vadd.f32 %v533, %v339
    %v535 = vadd.f32 %v534, %v340
    %v536 = vadd.f32 %v535, %v341
    %v537 = vadd.f32 %v536, %v342
    %v538 = vadd.f32 %v537, %v343
    %v539 = vadd.f32 %v538, %v344
    %v540 = vadd.f32 %v539, %v345
    %v541 = vadd.f32 %v540, %v346
    %v542 = vadd.f32 %v541, %v347
    %v543 = vadd.f32 %v542, %v348
    %v544 = vadd.f32 %v543, %v349
    %v545 = vadd.f32 %v544, %v350
    %v546 = vadd.f32 %v545, %v351
    %v547 = vadd.f32 %v546, %v352
    %v548 = vadd.f32 %v547, %v353
    %v549 = vadd.f32 %v548, %v354
    %v550 = vadd.f32 %v549, %v355
    %v551 = vadd.f32 %v550, %v356
    %v552 = vadd.f32 %v551, %v357
    %v553 = vadd.f32 %v552, %v358
    %v554 = vadd.f32 %v553, %v359
    %v555 = vadd.f32 %v554, %v360
    %v556 = vadd.f32 %v555, %v361
    %v557 = vadd.f32 %v556, %v362
    %v558 = vadd.f32 %v557, %v363
    %v559 = vadd.f32 %v558, %v364
    %v560 = vadd.f32 %v559, %v365
    %v561 = vadd.f32 %v560, %v366
    %v562 = vadd.f32 %v561, %v367
    %v563 = vadd.f32 %v562, %v368
    %v564 = vadd.f32 %v563, %v369
    %v565 = vadd.f32 %v564, %v370
    %v566 = vadd.f32 %v565, %v371
    %v567 = vadd.f32 %v566, %v372
    %v568 = vadd.f32 %v567, %v373
    %v569 = vadd.f32 %v568, %v374
    %v570 = vadd.f32 %v569, %v375
    %v571 = vadd.f32 %v570, %v376
    %v572 = vadd.f32 %v571, %v377
    %v573 = vadd.f32 %v572, %v378
    %v574 = vadd.f32 %v573, %v379
    %v575 = vadd.f32 %v574, %v380
    %v576 = vadd.f32 %v575, %v381
    %v577 = vadd.f32 %v576, %v382
    %v578 = vadd.f32 %v577, %v383
    %v579 = vadd.f32 %v578, %v384
    %v580 = vadd.f32 %v579, %v385
    %v581 = vadd.f32 %v580, %v386
    %v582 = vadd.f32 %v581, %v387
    %v583 = vadd.f32 %v582, %v388
    %v584 = vadd.f32 %v583, %v389
    %v585 = vadd.f32 %v584, %v390
    %v586 = vadd.f32 %v585, %v391
    %v587 = vadd.f32 %v586, %v392
    %v588 = vadd.f32 %v587, %v393
    %v589 = vadd.f32 %v588, %v394
    %v590 = vadd.f32 %v589, %v395
    %v591 = vadd.f32 %v590, %v396
    %v592 = vadd.f32 %v591, %v397
    %v593 = vadd.f32 %v592, %v398
    %v594 = vadd.f32 %v593, %v399
    %v595 = vadd.f32 %v594, %v400
    %v596 = vadd.f32 %v595, %v401
    %v597 = vadd.f32 %v596, %v402
    %v598 = vadd.f32 %v597, %v403
    %v599 = vadd.f32 %v598, %v404
    %v600 = vadd.f32 %v599, %v405
    %v601 = vadd.f32 %v600, %v406
    %v602 = vadd.f32 %v601, %v407
    %v603 = vadd.f32 %v602, %v408
    %v604 = vadd.f32 %v603, %v409
    %v605 = vadd.f32 %v604, %v410
    %v606 = vadd.f32 %v605, %v411
    %v607 = vadd.f32 %v606, %v412
    %v608 = vadd.f32 %v607, %v413
    %v609 = vadd.f32 %v608, %v414
    %v610 = vadd.f32 %v609, %v415
    %v611 = vadd.f32 %v610, %v416
    %v612 = vadd.f32 %v611, %v417
    %v613 = vadd.f32 %v612, %v418
    %v614 = vadd.f32 %v613, %v419
    %v615 = vadd.f32 %v614, %v420
    %v616 = vadd.f32 %v615, %v421
    %v617 = vadd.f32 %v616, %v422
    %v618 = vadd.f32 %v617, %v423
    %v619 = vadd.f32 %v618, %v424
    %v620 = vadd.f32 %v619, %v425
    %v621 = vadd.f32 %v620, %v426
    %v622 = vadd.f32 %v621, %v427
    %v623 = vadd.f32 %v622, %v428
    %v624 = vadd.f32 %v623, %v429
    %v625 = vadd.f32 %v624, %v430
    %v626 = vadd.f32 %v625, %v431
    %v627 = vrot.slane %v626, 4
    %v628 = vadd.f32 %v626, %v627
    %v629 = vrot.slane %v628, 2
    %v630 = vadd.f32 %v628, %v629
    %v631 = vrot.slane %v630, 1
    %v632 = vadd.f32 %v630, %v631
    %v633 = vadd.f32 %v432, %v433
    %v634 = vadd.f32 %v633, %v434
    %v635 = vadd.f32 %v634, %v435
    %v636 = vadd.f32 %v635, %v436
    %v637 = vadd.f32 %v636, %v437
    %v638 = vadd.f32 %v637, %v438
    %v639 = vadd.f32 %v638, %v439
    %v640 = vadd.f32 %v639, %v440
    %v641 = vadd.f32 %v640, %v441
    %v642 = vadd.f32 %v641, %v442
    %v643 = vadd.f32 %v642, %v443
    %v644 = vadd.f32 %v643, %v444
    %v645 = vadd.f32 %v644, %v445
    %v646 = vadd.f32 %v645, %v446
    %v647 = vadd.f32 %v646, %v447
    %v648 = vadd.f32 %v647, %v448
    %v649 = vadd.f32 %v648, %v449
    %v650 = vadd.f32 %v649, %v450
    %v651 = vadd.f32 %v650, %v451
    %v652 = vadd.f32 %v651, %v452
    %v653 = vadd.f32 %v652, %v453
    %v654 = vadd.f32 %v653, %v454
    %v655 = vadd.f32 %v654, %v455
    %v656 = vadd.f32 %v655, %v456
    %v657 = vadd.f32 %v656, %v457
    %v658 = vadd.f32 %v657, %v458
    %v659 = vadd.f32 %v658, %v459
    %v660 = vadd.f32 %v659, %v460
    %v661 = vadd.f32 %v660, %v461
    %v662 = vadd.f32 %v661, %v462
    %v663 = vadd.f32 %v662, %v463
    %v664 = vadd.f32 %v663, %v464
    %v665 = vadd.f32 %v664, %v465
    %v666 = vadd.f32 %v665, %v466
    %v667 = vadd.f32 %v666, %v467
    %v668 = vadd.f32 %v667, %v468
    %v669 = vadd.f32 %v668, %v469
    %v670 = vadd.f32 %v669, %v470
    %v671 = vadd.f32 %v670, %v471
    %v672 = vadd.f32 %v671, %v472
    %v673 = vadd.f32 %v672, %v473
    %v674 = vadd.f32 %v673, %v474
    %v675 = vadd.f32 %v674, %v475
    %v676 = vadd.f32 %v675, %v476
    %v677 = vadd.f32 %v676, %v477
    %v678 = vadd.f32 %v677, %v478
    %v679 = vadd.f32 %v678, %v479
    %v680 = vadd.f32 %v679, %v480
    %v681 = vadd.f32 %v680, %v481
    %v682 = vadd.f32 %v681, %v482
    %v683 = vadd.f32 %v682, %v483
    %v684 = vadd.f32 %v683, %v484
    %v685 = vadd.f32 %v684, %v485
    %v686 = vadd.f32 %v685, %v486
    %v687 = vadd.f32 %v686, %v487
    %v688 = vadd.f32 %v687, %v488
    %v689 = vadd.f32 %v688, %v489
    %v690 = vadd.f32 %v689, %v490
    %v691 = vadd.f32 %v690, %v491
    %v692 = vadd.f32 %v691, %v492
    %v693 = vadd.f32 %v692, %v493
    %v694 = vadd.f32 %v693, %v494
    %v695 = vadd.f32 %v694, %v495
    %v696 = vadd.f32 %v695, %v496
    %v697 = vadd.f32 %v696, %v497
    %v698 = vadd.f32 %v697, %v498
    %v699 = vadd.f32 %v698, %v499
    %v700 = vadd.f32 %v699, %v500
    %v701 = vadd.f32 %v700, %v501
    %v702 = vadd.f32 %v701, %v502
    %v703 = vadd.f32 %v702, %v503
    %v704 = vadd.f32 %v703, %v504
    %v705 = vadd.f32 %v704, %v505
    %v706 = vadd.f32 %v705, %v506
    %v707 = vadd.f32 %v706, %v507
    %v708 = vadd.f32 %v707, %v508
    %v709 = vadd.f32 %v708, %v509
    %v710 = vadd.f32 %v709, %v510
    %v711 = vadd.f32 %v710, %v511
    %v712 = vadd.f32 %v711, %v512
    %v713 = vadd.f32 %v712, %v513
    %v714 = vadd.f32 %v713, %v514
    %v715 = vadd.f32 %v714, %v515
    %v716 = vadd.f32 %v715, %v516
    %v717 = vadd.f32 %v716, %v517
    %v718 = vadd.f32 %v717, %v518
    %v719 = vadd.f32 %v718, %v519
    %v720 = vadd.f32 %v719, %v520
    %v721 = vadd.f32 %v720, %v521
    %v722 = vadd.f32 %v721, %v522
    %v723 = vadd.f32 %v722, %v523
    %v724 = vadd.f32 %v723, %v524
    %v725 = vadd.f32 %v724, %v525
    %v726 = vadd.f32 %v725, %v526
    %v727 = vadd.f32 %v726, %v527
    %v728 = vadd.f32 %v727, %v528
    %v729 = vadd.f32 %v728, %v529
    %v730 = vrot.slane %v729, 4
    %v731 = vadd.f32 %v729, %v730
    %v732 = vrot.slane %v731, 2
    %v733 = vadd.f32 %v731, %v732
    %v734 = vrot.slane %v733, 1
    %v735 = vadd.f32 %v733, %v734
    %vm738 = vcmask 1041409
    %v739 = vsel %vm738, %v735, %v632
    %vm741 = vcmask 1041408
    %v742 = vsel %vm741, %v739, 0.0
    %743 = vadd.xlane.f32.xlu0 %v742
    %v744 = vpop.xlane.xlu0 %743
    %v745 = vstv %s39
    %v746 = vadd.f32 %v744, %v745
    %s747 = sld [smem:[#allocation2 + $0x1]]
    %v748 = vld [vmem:[%s1] sm:$0xff]
    %v749 = vld [vmem:[%s1 + $0x8] sm:$0xff]
    %v750 = vld [vmem:[%s1 + $0x10] sm:$0xff]
    %v751 = vld [vmem:[%s1 + $0x18] sm:$0xff]
    %v752 = vld [vmem:[%s1 + $0x20] sm:$0xff]
    %v753 = vld [vmem:[%s1 + $0x28] sm:$0xff]
    %v754 = vld [vmem:[%s1 + $0x30] sm:$0xff]
    %v755 = vld [vmem:[%s1 + $0x38] sm:$0xff]
    %v756 = vld [vmem:[%s1 + $0x40] sm:$0xff]
    %v757 = vld [vmem:[%s1 + $0x48] sm:$0xff]
    %v758 = vld [vmem:[%s1 + $0x50] sm:$0xff]
    %v759 = vld [vmem:[%s1 + $0x58] sm:$0xff]
    %v760 = vld [vmem:[%s1 + $0x60] sm:$0xff]
    %v761 = vld [vmem:[%s1 + $0x68] sm:$0xff]
    %v762 = vld [vmem:[%s1 + $0x70] sm:$0xff]
    %v763 = vld [vmem:[%s1 + $0x78] sm:$0xff]
    %v764 = vld [vmem:[%s1 + $0x80] sm:$0xff]
    %v765 = vld [vmem:[%s1 + $0x88] sm:$0xff]
    %v766 = vld [vmem:[%s1 + $0x90] sm:$0xff]
    %v767 = vld [vmem:[%s1 + $0x98] sm:$0xff]
    %v768 = vld [vmem:[%s1 + $0xa0] sm:$0xff]
    %v769 = vld [vmem:[%s1 + $0xa8] sm:$0xff]
    %v770 = vld [vmem:[%s1 + $0xb0] sm:$0xff]
    %v771 = vld [vmem:[%s1 + $0xb8] sm:$0xff]
    %v772 = vld [vmem:[%s1 + $0xc0] sm:$0xff]
    %v773 = vld [vmem:[%s1 + $0xc8] sm:$0xff]
    %v774 = vld [vmem:[%s1 + $0xd0] sm:$0xff]
    %v775 = vld [vmem:[%s1 + $0xd8] sm:$0xff]
    %v776 = vld [vmem:[%s1 + $0xe0] sm:$0xff]
    %v777 = vld [vmem:[%s1 + $0xe8] sm:$0xff]
    %v778 = vld [vmem:[%s1 + $0xf0] sm:$0xff]
    %v779 = vld [vmem:[%s1 + $0xf8] sm:$0xff]
    %v780 = vld [vmem:[%s1 + $0x100] sm:$0xff]
    %v781 = vld [vmem:[%s1 + $0x108] sm:$0xff]
    %v782 = vld [vmem:[%s1 + $0x110] sm:$0xff]
    %v783 = vld [vmem:[%s1 + $0x118] sm:$0xff]
    %v784 = vld [vmem:[%s1 + $0x120] sm:$0xff]
    %v785 = vld [vmem:[%s1 + $0x128] sm:$0xff]
    %v786 = vld [vmem:[%s1 + $0x130] sm:$0xff]
    %v787 = vld [vmem:[%s1 + $0x138] sm:$0xff]
    %v788 = vld [vmem:[%s1 + $0x140] sm:$0xff]
    %v789 = vld [vmem:[%s1 + $0x148] sm:$0xff]
    %v790 = vld [vmem:[%s1 + $0x150] sm:$0xff]
    %v791 = vld [vmem:[%s1 + $0x158] sm:$0xff]
    %v792 = vld [vmem:[%s1 + $0x160] sm:$0xff]
    %v793 = vld [vmem:[%s1 + $0x168] sm:$0xff]
    %v794 = vld [vmem:[%s1 + $0x170] sm:$0xff]
    %v795 = vld [vmem:[%s1 + $0x178] sm:$0xff]
    %v796 = vld [vmem:[%s1 + $0x180] sm:$0xff]
    %v797 = vld [vmem:[%s1 + $0x188] sm:$0xff]
    %v798 = vld [vmem:[%s1 + $0x190] sm:$0xff]
    %v799 = vld [vmem:[%s1 + $0x198] sm:$0xff]
    %v800 = vld [vmem:[%s1 + $0x1a0] sm:$0xff]
    %v801 = vld [vmem:[%s1 + $0x1a8] sm:$0xff]
    %v802 = vld [vmem:[%s1 + $0x1b0] sm:$0xff]
    %v803 = vld [vmem:[%s1 + $0x1b8] sm:$0xff]
    %v804 = vld [vmem:[%s1 + $0x1c0] sm:$0xff]
    %v805 = vld [vmem:[%s1 + $0x1c8] sm:$0xff]
    %v806 = vld [vmem:[%s1 + $0x1d0] sm:$0xff]
    %v807 = vld [vmem:[%s1 + $0x1d8] sm:$0xff]
    %v808 = vld [vmem:[%s1 + $0x1e0] sm:$0xff]
    %v809 = vld [vmem:[%s1 + $0x1e8] sm:$0xff]
    %v810 = vld [vmem:[%s1 + $0x1f0] sm:$0xff]
    %v811 = vld [vmem:[%s1 + $0x1f8] sm:$0xff]
    %v812 = vld [vmem:[%s1 + $0x200] sm:$0xff]
    %v813 = vld [vmem:[%s1 + $0x208] sm:$0xff]
    %v814 = vld [vmem:[%s1 + $0x210] sm:$0xff]
    %v815 = vld [vmem:[%s1 + $0x218] sm:$0xff]
    %v816 = vld [vmem:[%s1 + $0x220] sm:$0xff]
    %v817 = vld [vmem:[%s1 + $0x228] sm:$0xff]
    %v818 = vld [vmem:[%s1 + $0x230] sm:$0xff]
    %v819 = vld [vmem:[%s1 + $0x238] sm:$0xff]
    %v820 = vld [vmem:[%s1 + $0x240] sm:$0xff]
    %v821 = vld [vmem:[%s1 + $0x248] sm:$0xff]
    %v822 = vld [vmem:[%s1 + $0x250] sm:$0xff]
    %v823 = vld [vmem:[%s1 + $0x258] sm:$0xff]
    %v824 = vld [vmem:[%s1 + $0x260] sm:$0xff]
    %v825 = vld [vmem:[%s1 + $0x268] sm:$0xff]
    %v826 = vld [vmem:[%s1 + $0x270] sm:$0xff]
    %v827 = vld [vmem:[%s1 + $0x278] sm:$0xff]
    %v828 = vld [vmem:[%s1 + $0x280] sm:$0xff]
    %v829 = vld [vmem:[%s1 + $0x288] sm:$0xff]
    %v830 = vld [vmem:[%s1 + $0x290] sm:$0xff]
    %v831 = vld [vmem:[%s1 + $0x298] sm:$0xff]
    %v832 = vld [vmem:[%s1 + $0x2a0] sm:$0xff]
    %v833 = vld [vmem:[%s1 + $0x2a8] sm:$0xff]
    %v834 = vld [vmem:[%s1 + $0x2b0] sm:$0xff]
    %v835 = vld [vmem:[%s1 + $0x2b8] sm:$0xff]
    %v836 = vld [vmem:[%s1 + $0x2c0] sm:$0xff]
    %v837 = vld [vmem:[%s1 + $0x2c8] sm:$0xff]
    %v838 = vld [vmem:[%s1 + $0x2d0] sm:$0xff]
    %v839 = vld [vmem:[%s1 + $0x2d8] sm:$0xff]
    %v840 = vld [vmem:[%s1 + $0x2e0] sm:$0xff]
    %v841 = vld [vmem:[%s1 + $0x2e8] sm:$0xff]
    %v842 = vld [vmem:[%s1 + $0x2f0] sm:$0xff]
    %v843 = vld [vmem:[%s1 + $0x2f8] sm:$0xff]
    %v844 = vld [vmem:[%s1 + $0x300] sm:$0xff]
    %v845 = vld [vmem:[%s1 + $0x308] sm:$0xff]
    %v846 = vld [vmem:[%s4] sm:$0xff]
    %v847 = vld [vmem:[%s4 + $0x8] sm:$0xff]
    %v848 = vld [vmem:[%s4 + $0x10] sm:$0xff]
    %v849 = vld [vmem:[%s4 + $0x18] sm:$0xff]
    %v850 = vld [vmem:[%s4 + $0x20] sm:$0xff]
    %v851 = vld [vmem:[%s4 + $0x28] sm:$0xff]
    %v852 = vld [vmem:[%s4 + $0x30] sm:$0xff]
    %v853 = vld [vmem:[%s4 + $0x38] sm:$0xff]
    %v854 = vld [vmem:[%s4 + $0x40] sm:$0xff]
    %v855 = vld [vmem:[%s4 + $0x48] sm:$0xff]
    %v856 = vld [vmem:[%s4 + $0x50] sm:$0xff]
    %v857 = vld [vmem:[%s4 + $0x58] sm:$0xff]
    %v858 = vld [vmem:[%s4 + $0x60] sm:$0xff]
    %v859 = vld [vmem:[%s4 + $0x68] sm:$0xff]
    %v860 = vld [vmem:[%s4 + $0x70] sm:$0xff]
    %v861 = vld [vmem:[%s4 + $0x78] sm:$0xff]
    %v862 = vld [vmem:[%s4 + $0x80] sm:$0xff]
    %v863 = vld [vmem:[%s4 + $0x88] sm:$0xff]
    %v864 = vld [vmem:[%s4 + $0x90] sm:$0xff]
    %v865 = vld [vmem:[%s4 + $0x98] sm:$0xff]
    %v866 = vld [vmem:[%s4 + $0xa0] sm:$0xff]
    %v867 = vld [vmem:[%s4 + $0xa8] sm:$0xff]
    %v868 = vld [vmem:[%s4 + $0xb0] sm:$0xff]
    %v869 = vld [vmem:[%s4 + $0xb8] sm:$0xff]
    %v870 = vld [vmem:[%s4 + $0xc0] sm:$0xff]
    %v871 = vld [vmem:[%s4 + $0xc8] sm:$0xff]
    %v872 = vld [vmem:[%s4 + $0xd0] sm:$0xff]
    %v873 = vld [vmem:[%s4 + $0xd8] sm:$0xff]
    %v874 = vld [vmem:[%s4 + $0xe0] sm:$0xff]
    %v875 = vld [vmem:[%s4 + $0xe8] sm:$0xff]
    %v876 = vld [vmem:[%s4 + $0xf0] sm:$0xff]
    %v877 = vld [vmem:[%s4 + $0xf8] sm:$0xff]
    %v878 = vld [vmem:[%s4 + $0x100] sm:$0xff]
    %v879 = vld [vmem:[%s4 + $0x108] sm:$0xff]
    %v880 = vld [vmem:[%s4 + $0x110] sm:$0xff]
    %v881 = vld [vmem:[%s4 + $0x118] sm:$0xff]
    %v882 = vld [vmem:[%s4 + $0x120] sm:$0xff]
    %v883 = vld [vmem:[%s4 + $0x128] sm:$0xff]
    %v884 = vld [vmem:[%s4 + $0x130] sm:$0xff]
    %v885 = vld [vmem:[%s4 + $0x138] sm:$0xff]
    %v886 = vld [vmem:[%s4 + $0x140] sm:$0xff]
    %v887 = vld [vmem:[%s4 + $0x148] sm:$0xff]
    %v888 = vld [vmem:[%s4 + $0x150] sm:$0xff]
    %v889 = vld [vmem:[%s4 + $0x158] sm:$0xff]
    %v890 = vld [vmem:[%s4 + $0x160] sm:$0xff]
    %v891 = vld [vmem:[%s4 + $0x168] sm:$0xff]
    %v892 = vld [vmem:[%s4 + $0x170] sm:$0xff]
    %v893 = vld [vmem:[%s4 + $0x178] sm:$0xff]
    %v894 = vld [vmem:[%s4 + $0x180] sm:$0xff]
    %v895 = vmul.f32 %v748, %v846
    %v896 = vmul.f32 %v749, %v847
    %v897 = vmul.f32 %v750, %v848
    %v898 = vmul.f32 %v751, %v849
    %v899 = vmul.f32 %v752, %v850
    %v900 = vmul.f32 %v753, %v851
    %v901 = vmul.f32 %v754, %v852
    %v902 = vmul.f32 %v755, %v853
    %v903 = vmul.f32 %v756, %v854
    %v904 = vmul.f32 %v757, %v855
    %v905 = vmul.f32 %v758, %v856
    %v906 = vmul.f32 %v759, %v857
    %v907 = vmul.f32 %v760, %v858
    %v908 = vmul.f32 %v761, %v859
    %v909 = vmul.f32 %v762, %v860
    %v910 = vmul.f32 %v763, %v861
    %v911 = vmul.f32 %v764, %v862
    %v912 = vmul.f32 %v765, %v863
    %v913 = vmul.f32 %v766, %v864
    %v914 = vmul.f32 %v767, %v865
    %v915 = vmul.f32 %v768, %v866
    %v916 = vmul.f32 %v769, %v867
    %v917 = vmul.f32 %v770, %v868
    %v918 = vmul.f32 %v771, %v869
    %v919 = vmul.f32 %v772, %v870
    %v920 = vmul.f32 %v773, %v871
    %v921 = vmul.f32 %v774, %v872
    %v922 = vmul.f32 %v775, %v873
    %v923 = vmul.f32 %v776, %v874
    %v924 = vmul.f32 %v777, %v875
    %v925 = vmul.f32 %v778, %v876
    %v926 = vmul.f32 %v779, %v877
    %v927 = vmul.f32 %v780, %v878
    %v928 = vmul.f32 %v781, %v879
    %v929 = vmul.f32 %v782, %v880
    %v930 = vmul.f32 %v783, %v881
    %v931 = vmul.f32 %v784, %v882
    %v932 = vmul.f32 %v785, %v883
    %v933 = vmul.f32 %v786, %v884
    %v934 = vmul.f32 %v787, %v885
    %v935 = vmul.f32 %v788, %v886
    %v936 = vmul.f32 %v789, %v887
    %v937 = vmul.f32 %v790, %v888
    %v938 = vmul.f32 %v791, %v889
    %v939 = vmul.f32 %v792, %v890
    %v940 = vmul.f32 %v793, %v891
    %v941 = vmul.f32 %v794, %v892
    %v942 = vmul.f32 %v795, %v893
    %v943 = vmul.f32 %v796, %v894
    %v944 = vmul.f32 %v797, %v846
    %v945 = vmul.f32 %v798, %v847
    %v946 = vmul.f32 %v799, %v848
    %v947 = vmul.f32 %v800, %v849
    %v948 = vmul.f32 %v801, %v850
    %v949 = vmul.f32 %v802, %v851
    %v950 = vmul.f32 %v803, %v852
    %v951 = vmul.f32 %v804, %v853
    %v952 = vmul.f32 %v805, %v854
    %v953 = vmul.f32 %v806, %v855
    %v954 = vmul.f32 %v807, %v856
    %v955 = vmul.f32 %v808, %v857
    %v956 = vmul.f32 %v809, %v858
    %v957 = vmul.f32 %v810, %v859
    %v958 = vmul.f32 %v811, %v860
    %v959 = vmul.f32 %v812, %v861
    %v960 = vmul.f32 %v813, %v862
    %v961 = vmul.f32 %v814, %v863
    %v962 = vmul.f32 %v815, %v864
    %v963 = vmul.f32 %v816, %v865
    %v964 = vmul.f32 %v817, %v866
    %v965 = vmul.f32 %v818, %v867
    %v966 = vmul.f32 %v819, %v868
    %v967 = vmul.f32 %v820, %v869
    %v968 = vmul.f32 %v821, %v870
    %v969 = vmul.f32 %v822, %v871
    %v970 = vmul.f32 %v823, %v872
    %v971 = vmul.f32 %v824, %v873
    %v972 = vmul.f32 %v825, %v874
    %v973 = vmul.f32 %v826, %v875
    %v974 = vmul.f32 %v827, %v876
    %v975 = vmul.f32 %v828, %v877
    %v976 = vmul.f32 %v829, %v878
    %v977 = vmul.f32 %v830, %v879
    %v978 = vmul.f32 %v831, %v880
    %v979 = vmul.f32 %v832, %v881
    %v980 = vmul.f32 %v833, %v882
    %v981 = vmul.f32 %v834, %v883
    %v982 = vmul.f32 %v835, %v884
    %v983 = vmul.f32 %v836, %v885
    %v984 = vmul.f32 %v837, %v886
    %v985 = vmul.f32 %v838, %v887
    %v986 = vmul.f32 %v839, %v888
    %v987 = vmul.f32 %v840, %v889
    %v988 = vmul.f32 %v841, %v890
    %v989 = vmul.f32 %v842, %v891
    %v990 = vmul.f32 %v843, %v892
    %v991 = vmul.f32 %v844, %v893
    %v992 = vmul.f32 %v845, %v894
    %v993 = vadd.f32 %v895, %v896
    %v994 = vadd.f32 %v993, %v897
    %v995 = vadd.f32 %v994, %v898
    %v996 = vadd.f32 %v995, %v899
    %v997 = vadd.f32 %v996, %v900
    %v998 = vadd.f32 %v997, %v901
    %v999 = vadd.f32 %v998, %v902
    %v1000 = vadd.f32 %v999, %v903
    %v1001 = vadd.f32 %v1000, %v904
    %v1002 = vadd.f32 %v1001, %v905
    %v1003 = vadd.f32 %v1002, %v906
    %v1004 = vadd.f32 %v1003, %v907
    %v1005 = vadd.f32 %v1004, %v908
    %v1006 = vadd.f32 %v1005, %v909
    %v1007 = vadd.f32 %v1006, %v910
    %v1008 = vadd.f32 %v1007, %v911
    %v1009 = vadd.f32 %v1008, %v912
    %v1010 = vadd.f32 %v1009, %v913
    %v1011 = vadd.f32 %v1010, %v914
    %v1012 = vadd.f32 %v1011, %v915
    %v1013 = vadd.f32 %v1012, %v916
    %v1014 = vadd.f32 %v1013, %v917
    %v1015 = vadd.f32 %v1014, %v918
    %v1016 = vadd.f32 %v1015, %v919
    %v1017 = vadd.f32 %v1016, %v920
    %v1018 = vadd.f32 %v1017, %v921
    %v1019 = vadd.f32 %v1018, %v922
    %v1020 = vadd.f32 %v1019, %v923
    %v1021 = vadd.f32 %v1020, %v924
    %v1022 = vadd.f32 %v1021, %v925
    %v1023 = vadd.f32 %v1022, %v926
    %v1024 = vadd.f32 %v1023, %v927
    %v1025 = vadd.f32 %v1024, %v928
    %v1026 = vadd.f32 %v1025, %v929
    %v1027 = vadd.f32 %v1026, %v930
    %v1028 = vadd.f32 %v1027, %v931
    %v1029 = vadd.f32 %v1028, %v932
    %v1030 = vadd.f32 %v1029, %v933
    %v1031 = vadd.f32 %v1030, %v934
    %v1032 = vadd.f32 %v1031, %v935
    %v1033 = vadd.f32 %v1032, %v936
    %v1034 = vadd.f32 %v1033, %v937
    %v1035 = vadd.f32 %v1034, %v938
    %v1036 = vadd.f32 %v1035, %v939
    %v1037 = vadd.f32 %v1036, %v940
    %v1038 = vadd.f32 %v1037, %v941
    %v1039 = vadd.f32 %v1038, %v942
    %v1040 = vadd.f32 %v1039, %v943
    %v1041 = vrot.slane %v1040, 4
    %v1042 = vadd.f32 %v1040, %v1041
    %v1043 = vrot.slane %v1042, 2
    %v1044 = vadd.f32 %v1042, %v1043
    %v1045 = vrot.slane %v1044, 1
    %v1046 = vadd.f32 %v1044, %v1045
    %v1047 = vadd.f32 %v944, %v945
    %v1048 = vadd.f32 %v1047, %v946
    %v1049 = vadd.f32 %v1048, %v947
    %v1050 = vadd.f32 %v1049, %v948
    %v1051 = vadd.f32 %v1050, %v949
    %v1052 = vadd.f32 %v1051, %v950
    %v1053 = vadd.f32 %v1052, %v951
    %v1054 = vadd.f32 %v1053, %v952
    %v1055 = vadd.f32 %v1054, %v953
    %v1056 = vadd.f32 %v1055, %v954
    %v1057 = vadd.f32 %v1056, %v955
    %v1058 = vadd.f32 %v1057, %v956
    %v1059 = vadd.f32 %v1058, %v957
    %v1060 = vadd.f32 %v1059, %v958
    %v1061 = vadd.f32 %v1060, %v959
    %v1062 = vadd.f32 %v1061, %v960
    %v1063 = vadd.f32 %v1062, %v961
    %v1064 = vadd.f32 %v1063, %v962
    %v1065 = vadd.f32 %v1064, %v963
    %v1066 = vadd.f32 %v1065, %v964
    %v1067 = vadd.f32 %v1066, %v965
    %v1068 = vadd.f32 %v1067, %v966
    %v1069 = vadd.f32 %v1068, %v967
    %v1070 = vadd.f32 %v1069, %v968
    %v1071 = vadd.f32 %v1070, %v969
    %v1072 = vadd.f32 %v1071, %v970
    %v1073 = vadd.f32 %v1072, %v971
    %v1074 = vadd.f32 %v1073, %v972
    %v1075 = vadd.f32 %v1074, %v973
    %v1076 = vadd.f32 %v1075, %v974
    %v1077 = vadd.f32 %v1076, %v975
    %v1078 = vadd.f32 %v1077, %v976
    %v1079 = vadd.f32 %v1078, %v977
    %v1080 = vadd.f32 %v1079, %v978
    %v1081 = vadd.f32 %v1080, %v979
    %v1082 = vadd.f32 %v1081, %v980
    %v1083 = vadd.f32 %v1082, %v981
    %v1084 = vadd.f32 %v1083, %v982
    %v1085 = vadd.f32 %v1084, %v983
    %v1086 = vadd.f32 %v1085, %v984
    %v1087 = vadd.f32 %v1086, %v985
    %v1088 = vadd.f32 %v1087, %v986
    %v1089 = vadd.f32 %v1088, %v987
    %v1090 = vadd.f32 %v1089, %v988
    %v1091 = vadd.f32 %v1090, %v989
    %v1092 = vadd.f32 %v1091, %v990
    %v1093 = vadd.f32 %v1092, %v991
    %v1094 = vadd.f32 %v1093, %v992
    %v1095 = vrot.slane %v1094, 4
    %v1096 = vadd.f32 %v1094, %v1095
    %v1097 = vrot.slane %v1096, 2
    %v1098 = vadd.f32 %v1096, %v1097
    %v1099 = vrot.slane %v1098, 1
    %v1100 = vadd.f32 %v1098, %v1099
    %v1103 = vsel %vm738, %v1100, %v1046
    %v1105 = vsel %vm741, %v1103, 0.0
    %1106 = vadd.xlane.f32.xlu0 %v1105
    %v1107 = vpop.xlane.xlu0 %1106
    %v1108 = vstv %s747
    %v1109 = vadd.f32 %v1107, %v1108
    %s1110 = sld [smem:[#allocation2 + $0x2]]
    %v1111 = vld [vmem:[%s2] sm:$0xff]
    %v1112 = vld [vmem:[%s2 + $0x8] sm:$0xff]
    %v1113 = vld [vmem:[%s2 + $0x10] sm:$0xff]
    %v1114 = vld [vmem:[%s2 + $0x18] sm:$0xff]
    %v1115 = vld [vmem:[%s2 + $0x20] sm:$0xff]
    %v1116 = vld [vmem:[%s2 + $0x28] sm:$0xff]
    %v1117 = vld [vmem:[%s2 + $0x30] sm:$0xff]
    %v1118 = vld [vmem:[%s2 + $0x38] sm:$0xff]
    %v1119 = vld [vmem:[%s2 + $0x40] sm:$0xff]
    %v1120 = vld [vmem:[%s2 + $0x48] sm:$0xff]
    %v1121 = vld [vmem:[%s2 + $0x50] sm:$0xff]
    %v1122 = vld [vmem:[%s2 + $0x58] sm:$0xff]
    %v1123 = vld [vmem:[%s2 + $0x60] sm:$0xff]
    %v1124 = vld [vmem:[%s2 + $0x68] sm:$0xff]
    %v1125 = vld [vmem:[%s2 + $0x70] sm:$0xff]
    %v1126 = vld [vmem:[%s2 + $0x78] sm:$0xff]
    %v1127 = vld [vmem:[%s2 + $0x80] sm:$0xff]
    %v1128 = vld [vmem:[%s2 + $0x88] sm:$0xff]
    %v1129 = vld [vmem:[%s2 + $0x90] sm:$0xff]
    %v1130 = vld [vmem:[%s2 + $0x98] sm:$0xff]
    %v1131 = vld [vmem:[%s2 + $0xa0] sm:$0xff]
    %v1132 = vld [vmem:[%s2 + $0xa8] sm:$0xff]
    %v1133 = vld [vmem:[%s2 + $0xb0] sm:$0xff]
    %v1134 = vld [vmem:[%s2 + $0xb8] sm:$0xff]
    %v1135 = vld [vmem:[%s2 + $0xc0] sm:$0xf]
    %v1136 = vld [vmem:[%s2 + $0xc8] sm:$0xff]
    %v1137 = vld [vmem:[%s2 + $0xd0] sm:$0xff]
    %v1138 = vld [vmem:[%s2 + $0xd8] sm:$0xff]
    %v1139 = vld [vmem:[%s2 + $0xe0] sm:$0xff]
    %v1140 = vld [vmem:[%s2 + $0xe8] sm:$0xff]
    %v1141 = vld [vmem:[%s2 + $0xf0] sm:$0xff]
    %v1142 = vld [vmem:[%s2 + $0xf8] sm:$0xff]
    %v1143 = vld [vmem:[%s2 + $0x100] sm:$0xff]
    %v1144 = vld [vmem:[%s2 + $0x108] sm:$0xff]
    %v1145 = vld [vmem:[%s2 + $0x110] sm:$0xff]
    %v1146 = vld [vmem:[%s2 + $0x118] sm:$0xff]
    %v1147 = vld [vmem:[%s2 + $0x120] sm:$0xff]
    %v1148 = vld [vmem:[%s2 + $0x128] sm:$0xff]
    %v1149 = vld [vmem:[%s2 + $0x130] sm:$0xff]
    %v1150 = vld [vmem:[%s2 + $0x138] sm:$0xff]
    %v1151 = vld [vmem:[%s2 + $0x140] sm:$0xff]
    %v1152 = vld [vmem:[%s2 + $0x148] sm:$0xff]
    %v1153 = vld [vmem:[%s2 + $0x150] sm:$0xff]
    %v1154 = vld [vmem:[%s2 + $0x158] sm:$0xff]
    %v1155 = vld [vmem:[%s2 + $0x160] sm:$0xff]
    %v1156 = vld [vmem:[%s2 + $0x168] sm:$0xff]
    %v1157 = vld [vmem:[%s2 + $0x170] sm:$0xff]
    %v1158 = vld [vmem:[%s2 + $0x178] sm:$0xff]
    %v1159 = vld [vmem:[%s2 + $0x180] sm:$0xff]
    %v1160 = vld [vmem:[%s2 + $0x188] sm:$0xf]
    %v1161 = vld [vmem:[%s5] sm:$0xff]
    %v1162 = vld [vmem:[%s5 + $0x8] sm:$0xff]
    %v1163 = vld [vmem:[%s5 + $0x10] sm:$0xff]
    %v1164 = vld [vmem:[%s5 + $0x18] sm:$0xff]
    %v1165 = vld [vmem:[%s5 + $0x20] sm:$0xff]
    %v1166 = vld [vmem:[%s5 + $0x28] sm:$0xff]
    %v1167 = vld [vmem:[%s5 + $0x30] sm:$0xff]
    %v1168 = vld [vmem:[%s5 + $0x38] sm:$0xff]
    %v1169 = vld [vmem:[%s5 + $0x40] sm:$0xff]
    %v1170 = vld [vmem:[%s5 + $0x48] sm:$0xff]
    %v1171 = vld [vmem:[%s5 + $0x50] sm:$0xff]
    %v1172 = vld [vmem:[%s5 + $0x58] sm:$0xff]
    %v1173 = vld [vmem:[%s5 + $0x60] sm:$0xff]
    %v1174 = vld [vmem:[%s5 + $0x68] sm:$0xff]
    %v1175 = vld [vmem:[%s5 + $0x70] sm:$0xff]
    %v1176 = vld [vmem:[%s5 + $0x78] sm:$0xff]
    %v1177 = vld [vmem:[%s5 + $0x80] sm:$0xff]
    %v1178 = vld [vmem:[%s5 + $0x88] sm:$0xff]
    %v1179 = vld [vmem:[%s5 + $0x90] sm:$0xff]
    %v1180 = vld [vmem:[%s5 + $0x98] sm:$0xff]
    %v1181 = vld [vmem:[%s5 + $0xa0] sm:$0xff]
    %v1182 = vld [vmem:[%s5 + $0xa8] sm:$0xff]
    %v1183 = vld [vmem:[%s5 + $0xb0] sm:$0xff]
    %v1184 = vld [vmem:[%s5 + $0xb8] sm:$0xff]
    %v1185 = vld [vmem:[%s5 + $0xc0] sm:$0xf]
    %v1186 = vmul.f32 %v1111, %v1161
    %v1187 = vmul.f32 %v1112, %v1162
    %v1188 = vmul.f32 %v1113, %v1163
    %v1189 = vmul.f32 %v1114, %v1164
    %v1190 = vmul.f32 %v1115, %v1165
    %v1191 = vmul.f32 %v1116, %v1166
    %v1192 = vmul.f32 %v1117, %v1167
    %v1193 = vmul.f32 %v1118, %v1168
    %v1194 = vmul.f32 %v1119, %v1169
    %v1195 = vmul.f32 %v1120, %v1170
    %v1196 = vmul.f32 %v1121, %v1171
    %v1197 = vmul.f32 %v1122, %v1172
    %v1198 = vmul.f32 %v1123, %v1173
    %v1199 = vmul.f32 %v1124, %v1174
    %v1200 = vmul.f32 %v1125, %v1175
    %v1201 = vmul.f32 %v1126, %v1176
    %v1202 = vmul.f32 %v1127, %v1177
    %v1203 = vmul.f32 %v1128, %v1178
    %v1204 = vmul.f32 %v1129, %v1179
    %v1205 = vmul.f32 %v1130, %v1180
    %v1206 = vmul.f32 %v1131, %v1181
    %v1207 = vmul.f32 %v1132, %v1182
    %v1208 = vmul.f32 %v1133, %v1183
    %v1209 = vmul.f32 %v1134, %v1184
    %v1210 = vmul.f32 %v1135, %v1185
    %v1211 = vmul.f32 %v1136, %v1161
    %v1212 = vmul.f32 %v1137, %v1162
    %v1213 = vmul.f32 %v1138, %v1163
    %v1214 = vmul.f32 %v1139, %v1164
    %v1215 = vmul.f32 %v1140, %v1165
    %v1216 = vmul.f32 %v1141, %v1166
    %v1217 = vmul.f32 %v1142, %v1167
    %v1218 = vmul.f32 %v1143, %v1168
    %v1219 = vmul.f32 %v1144, %v1169
    %v1220 = vmul.f32 %v1145, %v1170
    %v1221 = vmul.f32 %v1146, %v1171
    %v1222 = vmul.f32 %v1147, %v1172
    %v1223 = vmul.f32 %v1148, %v1173
    %v1224 = vmul.f32 %v1149, %v1174
    %v1225 = vmul.f32 %v1150, %v1175
    %v1226 = vmul.f32 %v1151, %v1176
    %v1227 = vmul.f32 %v1152, %v1177
    %v1228 = vmul.f32 %v1153, %v1178
    %v1229 = vmul.f32 %v1154, %v1179
    %v1230 = vmul.f32 %v1155, %v1180
    %v1231 = vmul.f32 %v1156, %v1181
    %v1232 = vmul.f32 %v1157, %v1182
    %v1233 = vmul.f32 %v1158, %v1183
    %v1234 = vmul.f32 %v1159, %v1184
    %v1235 = vmul.f32 %v1160, %v1185
    %v1236 = vadd.f32 %v1186, %v1187
    %v1237 = vadd.f32 %v1236, %v1188
    %v1238 = vadd.f32 %v1237, %v1189
    %v1239 = vadd.f32 %v1238, %v1190
    %v1240 = vadd.f32 %v1239, %v1191
    %v1241 = vadd.f32 %v1240, %v1192
    %v1242 = vadd.f32 %v1241, %v1193
    %v1243 = vadd.f32 %v1242, %v1194
    %v1244 = vadd.f32 %v1243, %v1195
    %v1245 = vadd.f32 %v1244, %v1196
    %v1246 = vadd.f32 %v1245, %v1197
    %v1247 = vadd.f32 %v1246, %v1198
    %v1248 = vadd.f32 %v1247, %v1199
    %v1249 = vadd.f32 %v1248, %v1200
    %v1250 = vadd.f32 %v1249, %v1201
    %v1251 = vadd.f32 %v1250, %v1202
    %v1252 = vadd.f32 %v1251, %v1203
    %v1253 = vadd.f32 %v1252, %v1204
    %v1254 = vadd.f32 %v1253, %v1205
    %v1255 = vadd.f32 %v1254, %v1206
    %v1256 = vadd.f32 %v1255, %v1207
    %v1257 = vadd.f32 %v1256, %v1208
    %v1258 = vadd.f32 %v1257, %v1209
    %vm1259 = vcmask 1043456
    %v1260 = vsel %vm1259, %v1210, 0.0
    %v1261 = vadd.f32 %v1258, %v1260
    %v1262 = vrot.slane %v1261, 4
    %v1263 = vadd.f32 %v1261, %v1262
    %v1264 = vrot.slane %v1263, 2
    %v1265 = vadd.f32 %v1263, %v1264
    %v1266 = vrot.slane %v1265, 1
    %v1267 = vadd.f32 %v1265, %v1266
    %v1268 = vadd.f32 %v1211, %v1212
    %v1269 = vadd.f32 %v1268, %v1213
    %v1270 = vadd.f32 %v1269, %v1214
    %v1271 = vadd.f32 %v1270, %v1215
    %v1272 = vadd.f32 %v1271, %v1216
    %v1273 = vadd.f32 %v1272, %v1217
    %v1274 = vadd.f32 %v1273, %v1218
    %v1275 = vadd.f32 %v1274, %v1219
    %v1276 = vadd.f32 %v1275, %v1220
    %v1277 = vadd.f32 %v1276, %v1221
    %v1278 = vadd.f32 %v1277, %v1222
    %v1279 = vadd.f32 %v1278, %v1223
    %v1280 = vadd.f32 %v1279, %v1224
    %v1281 = vadd.f32 %v1280, %v1225
    %v1282 = vadd.f32 %v1281, %v1226
    %v1283 = vadd.f32 %v1282, %v1227
    %v1284 = vadd.f32 %v1283, %v1228
    %v1285 = vadd.f32 %v1284, %v1229
    %v1286 = vadd.f32 %v1285, %v1230
    %v1287 = vadd.f32 %v1286, %v1231
    %v1288 = vadd.f32 %v1287, %v1232
    %v1289 = vadd.f32 %v1288, %v1233
    %v1290 = vadd.f32 %v1289, %v1234
    %v1291 = vsel %vm1259, %v1235, 0.0
    %v1292 = vadd.f32 %v1290, %v1291
    %v1293 = vrot.slane %v1292, 4
    %v1294 = vadd.f32 %v1292, %v1293
    %v1295 = vrot.slane %v1294, 2
    %v1296 = vadd.f32 %v1294, %v1295
    %v1297 = vrot.slane %v1296, 1
    %v1298 = vadd.f32 %v1296, %v1297
    %v1301 = vsel %vm738, %v1298, %v1267
    %v1303 = vsel %vm741, %v1301, 0.0
    %1304 = vadd.xlane.f32.xlu0 %v1303
    %v1305 = vpop.xlane.xlu0 %1304
    %v1306 = vstv %s1110
    %v1307 = vadd.f32 %v1305, %v1306
    %vm1308 = vcmask 7168
    %v1309 = vsel %vm1308, %v746, %v1109
    %vm1310 = vcmask 15360
    %v1311 = vsel %vm1310, %v1309, %v1307
    %v1312 = vxor.u32 %v1311, 2147483648
    %v1313 = vmul.f32 %v1312, 1.442695
    %v1314 = vpow.pop %v1313
    %v1315 = vadd.f32 %v1314, 1.0
    %v1316 = vrcp.pop %v1315
    %v1317 = vmul.f32 1.0, %v1316
    %vm1318 = vcmask 17408
    %1319 = vst.msk [vmem:[%s7] sm:$0x3] %vm1318, %v1317
    // Predicated region
    $region34: #{tumor_classifier_forward.1} parent=1 // pred_check
      _
    $region35: #{tumor_classifier_forward.1} parent=1 // pred_check_branch
      %1321 = sbr.rel (0) target = $region37
    $region36: #{tumor_classifier_forward.1} parent=1 // pred_region
      _
    $region37: #{tumor_classifier_forward.1} parent=1 // pred_fallthru
      _
    // Predicated region
    $region38: #{tumor_classifier_forward.1} parent=1 // pred_check
      _
    $region39: #{tumor_classifier_forward.1} parent=1 // pred_check_branch
      %1323 = sbr.rel (0) target = $region41
    $region40: #{tumor_classifier_forward.1} parent=1 // pred_region
      _
    $region41: #{tumor_classifier_forward.1} parent=1 // pred_fallthru
      _
    %1324 = vsyncpa [#allocation3], 1

</llo_original>
